<compile_context>
chip_gen: v5e
topology: v5e:2x2
jax: 0.10.0
libtpu: 0.0.40
codegen_flags: <defaults>
</compile_context>

<pallas_src>
import functools

import jax
import jax.numpy as jnp
import numpy as np
from jax import lax
from jax.experimental import pallas as pl
from jax.experimental.pallas import tpu as pltpu


def _cdiv(a, b):
    return -(-a // b)


def _round_up(a, b):
    return _cdiv(a, b) * b


def _tpu_vmem_bytes():
    """Physical VMEM per TensorCore; falls back to the smallest generation (v7x)."""
    try:
        return int(pltpu.get_tpu_info().vmem_capacity_bytes)
    except Exception:
        return 64 << 20


def _default_ncores():
    """TensorCores reachable via megacore grid sharding (2 on v7x, else 1)."""
    try:
        dev = jax.devices()[0]
        for attr in ("num_cores", "core_count"):
            v = getattr(dev, attr, None)
            if isinstance(v, int) and v >= 1:
                return min(int(v), 2)
    except Exception:
        pass
    return 1


# ----------------------------------------------------------------------------
# Kernel 1: shifted first/second moments of x over T (lane axis).
#   y = x - c (c = first sample, numerically-safe shift)
#   xT (D, Tp) -> per-core partials  sum_y (ncores, D, 1),  y y^T (ncores, D, D)
# Padded tail columns (stored as exact zeros) contribute (-c) / c c^T each and
# are corrected analytically in JAX — no per-tile masking needed here.
# ----------------------------------------------------------------------------
def _moments_kernel(x_ref, c_ref, sum_ref, xtx_ref):
    @pl.when(pl.program_id(1) == 0)
    def _():
        sum_ref[...] = jnp.zeros_like(sum_ref)
        xtx_ref[...] = jnp.zeros_like(xtx_ref)

    yb = x_ref[...].astype(jnp.float32) - c_ref[...]            # (D, Tt)
    sum_ref[0] += jnp.sum(yb, axis=1, keepdims=True)            # (D, 1)
    xtx_ref[0] += lax.dot_general(                              # y y^T over lanes
        yb, yb, (((1,), (1,)), ((), ())),
        preferred_element_type=jnp.float32)


def compute_moments(xT, c, *, tile_t, ncores, vmem_limit):
    D, Tp = xT.shape
    tiles_per_core = Tp // (ncores * tile_t)
    return pl.pallas_call(
        _moments_kernel,
        out_shape=(jax.ShapeDtypeStruct((ncores, D, 1), jnp.float32),
                   jax.ShapeDtypeStruct((ncores, D, D), jnp.float32)),
        grid_spec=pltpu.PrefetchScalarGridSpec(
            num_scalar_prefetch=0,
            grid=(ncores, tiles_per_core),
            in_specs=[pl.BlockSpec((D, tile_t),
                                   lambda ci, t: (0, ci * tiles_per_core + t)),
                      pl.BlockSpec((D, 1), lambda ci, t: (0, 0))],
            out_specs=(pl.BlockSpec((1, D, 1), lambda ci, t: (ci, 0, 0)),
                       pl.BlockSpec((1, D, D), lambda ci, t: (ci, 0, 0)))),
        compiler_params=pltpu.CompilerParams(
            dimension_semantics=("parallel", "arbitrary"),
            vmem_limit_bytes=vmem_limit),
    )(xT, c)


# ----------------------------------------------------------------------------
# Kernel 2: one-time whitening projection  xq^T = wh^T (x^T - mean),
# fused with the K x K Gram accumulator G = xq xq^T (replaces the old
# post-convergence s2 pass).  Padded tail columns are masked to exactly 0, so
# they contribute 0 to G and only g'(0)=1 needs a correction downstream.
# ----------------------------------------------------------------------------
def _whiten_kernel(x_ref, mean_ref, wht_ref, xq_ref, gram_ref, *,
                   t_true, tile_t, tiles_per_core):
    ci = pl.program_id(0)
    t = pl.program_id(1)

    @pl.when(t == 0)
    def _():
        gram_ref[...] = jnp.zeros_like(gram_ref)

    base = (ci * tiles_per_core + t) * tile_t
    xb = x_ref[...].astype(jnp.float32)                         # (D, Tt)
    col = base + lax.broadcasted_iota(jnp.int32, xb.shape, 1)
    xc = jnp.where(col < t_true, xb - mean_ref[...], 0.0)       # center + mask pad
    xq = jnp.dot(wht_ref[...], xc,
                 preferred_element_type=jnp.float32)            # (K, Tt)
    xq_ref[...] = xq.astype(xq_ref.dtype)
    gram_ref[0] += lax.dot_general(xq, xq, (((1,), (1,)), ((), ())),
                                   preferred_element_type=jnp.float32)


def whiten_project(xT, mean, whT, *, tile_t, t_true, out_dtype, ncores,
                   vmem_limit):
    D, Tp = xT.shape
    K = whT.shape[0]
    tiles_per_core = Tp // (ncores * tile_t)
    kernel = functools.partial(_whiten_kernel, t_true=t_true, tile_t=tile_t,
                               tiles_per_core=tiles_per_core)
    xqT, gram = pl.pallas_call(
        kernel,
        out_shape=(jax.ShapeDtypeStruct((K, Tp), out_dtype),
                   jax.ShapeDtypeStruct((ncores, K, K), jnp.float32)),
        grid_spec=pltpu.PrefetchScalarGridSpec(
            num_scalar_prefetch=0,
            grid=(ncores, tiles_per_core),
            in_specs=[pl.BlockSpec((D, tile_t),
                                   lambda ci, t: (0, ci * tiles_per_core + t)),
                      pl.BlockSpec((D, 1), lambda ci, t: (0, 0)),
                      pl.BlockSpec((K, D), lambda ci, t: (0, 0))],
            out_specs=(pl.BlockSpec((K, tile_t),
                                    lambda ci, t: (0, ci * tiles_per_core + t)),
                       pl.BlockSpec((1, K, K), lambda ci, t: (ci, 0, 0)))),
        compiler_params=pltpu.CompilerParams(
            dimension_semantics=("parallel", "arbitrary"),
            vmem_limit_bytes=vmem_limit),
    )(xT, mean, whT)
    return xqT, gram.sum(0)


# ----------------------------------------------------------------------------
# Kernel 3: fused FastICA sufficient statistics (per fixed-point iteration).
#   wx     = W xq^T               (K, Tt)  lane-dense
#   term1 += g(wx) xq             (K, K)   MXU contraction over the lane axis
#   gpsum += sum_T g'(wx)         (K, 1)
# (The dead s2 accumulator from the previous version was removed.)
# ----------------------------------------------------------------------------
def _ica_stats_kernel(xq_ref, w_ref, term1_ref, gpsum_ref, *, use_gauss):
    @pl.when(pl.program_id(1) == 0)
    def _():
        term1_ref[...] = jnp.zeros_like(term1_ref)
        gpsum_ref[...] = jnp.zeros_like(gpsum_ref)

    xq = xq_ref[...].astype(jnp.float32)                        # (K, Tt)
    wx = lax.dot_general(w_ref[...], xq, (((1,), (0,)), ((), ())),
                         preferred_element_type=jnp.float32)    # (K, Tt)
    if use_gauss:
        wx2 = wx * wx
        e = jnp.exp(-0.5 * wx2)
        g = wx * e
        gprime = (1.0 - wx2) * e
    else:  # logcosh
        # TODO(synk): if profiling shows the single EUP slot binding, replace
        # jnp.tanh with a VPU polynomial approximation (VALU has slack here).
        g = jnp.tanh(wx)
        gprime = 1.0 - g * g

    term1_ref[0] += lax.dot_general(g, xq, (((1,), (1,)), ((), ())),
                                    preferred_element_type=jnp.float32)
    gpsum_ref[0] += jnp.sum(gprime, axis=1, keepdims=True)


def ica_stats(xqT, w, *, use_gauss, tile_t, ncores, vmem_limit):
    K, Tp = xqT.shape
    tiles_per_core = Tp // (ncores * tile_t)
    kernel = functools.partial(_ica_stats_kernel, use_gauss=use_gauss)
    itemsize = jnp.dtype(xqT.dtype).itemsize
    cost = pl.CostEstimate(
        flops=int(4 * K * K * Tp + 6 * K * Tp),
        transcendentals=int(K * Tp),
        bytes_accessed=int(K * Tp * itemsize + K * K * 4
                           + ncores * (K * K + K) * 4))
    term1, gpsum = pl.pallas_call(
        kernel,
        out_shape=(jax.ShapeDtypeStruct((ncores, K, K), jnp.float32),
                   jax.ShapeDtypeStruct((ncores, K, 1), jnp.float32)),
        grid_spec=pltpu.PrefetchScalarGridSpec(
            num_scalar_prefetch=0,
            grid=(ncores, tiles_per_core),
            in_specs=[pl.BlockSpec((K, tile_t),
                                   lambda ci, t: (0, ci * tiles_per_core + t)),
                      pl.BlockSpec((K, K), lambda ci, t: (0, 0))],
            out_specs=(pl.BlockSpec((1, K, K), lambda ci, t: (ci, 0, 0)),
                       pl.BlockSpec((1, K, 1), lambda ci, t: (ci, 0, 0)))),
        compiler_params=pltpu.CompilerParams(
            dimension_semantics=("parallel", "arbitrary"),
            vmem_limit_bytes=vmem_limit),
        cost_estimate=cost,
    )(xqT, w)
    # Sum the tiny per-core partials.
    return term1.sum(0), gpsum.sum(0)


# ----------------------------------------------------------------------------
# Small K x K / D x D linear algebra stays in plain JAX (no Pallas equivalent).
# ----------------------------------------------------------------------------
def _decorrelate(W):
    s, V = jnp.linalg.eigh(W @ W.T)
    d = 1.0 / jnp.sqrt(jnp.maximum(s, 1e-10))
    return (V * d) @ V.T @ W


@functools.partial(jax.jit,
                   static_argnames=("t_true", "n_pad", "n_comp", "tile_t",
                                    "ncores", "out_dtype", "vmem_limit"))
def _pca_whiten(xT, c, *, t_true, n_pad, n_comp, tile_t, ncores, out_dtype,
                vmem_limit):
    sum_p, xtx_p = compute_moments(xT, c, tile_t=tile_t, ncores=ncores,
                                   vmem_limit=vmem_limit)
    # Analytic pad correction: each zero-padded column contributed (-c) to the
    # shifted sum and c c^T to the shifted Gram.
    npf = jnp.float32(n_pad)
    sum_y = sum_p.sum(0) + npf * c                              # (D, 1)
    syy = xtx_p.sum(0) - npf * (c @ c.T)                        # (D, D)
    tT = jnp.float32(t_true)
    m_y = sum_y / tT
    mean = c + m_y                                              # (D, 1)
    # TODO(synk): diffsptk's PCA covariance normalization (1/T vs 1/(T-1)) is
    # not shown in the spec; using 1/T here.
    cov = syy / tT - m_y @ m_y.T
    evals, evecs = jnp.linalg.eigh(cov)                         # ascending
    evals = evals[::-1][:n_comp]                                # top-K, descending
    evecs = evecs[:, ::-1][:, :n_comp]                          # (D, K)
    wh = evecs / jnp.sqrt(jnp.maximum(evals, 1e-10))            # whitening projection
    xqT, gram = whiten_project(xT, mean, jnp.transpose(wh), tile_t=tile_t,
                               t_true=t_true, out_dtype=out_dtype,
                               ncores=ncores, vmem_limit=vmem_limit)
    return xqT, gram, mean, wh


@functools.partial(jax.jit,
                   static_argnames=("t_true", "n_pad", "n_iter", "eps",
                                    "use_gauss", "tile_t", "ncores",
                                    "vmem_limit"))
def _run_fastica(xqT, gram, W0, *, t_true, n_pad, n_iter, eps, use_gauss,
                 tile_t, ncores, vmem_limit):
    tT = jnp.float32(t_true)

    # TODO(synk): when K*Tp fits in VMEM the whole fixed-point loop could be
    # fused into a single pallas_call (Newton symmetric orthogonalization
    # instead of eigh); kept as per-iteration streamed passes here.
    def body(carry):
        i, W, _ = carry
        term1, gpsum = ica_stats(xqT, W, use_gauss=use_gauss, tile_t=tile_t,
                                 ncores=ncores, vmem_limit=vmem_limit)
        # Zero-padded tail columns contribute exactly g'(0) = 1 each (both
        # nonlinearities) to gpsum and exactly 0 to term1.
        gpsum = gpsum - jnp.float32(n_pad)
        W_new = (term1 - W * gpsum) / tT
        W_new = _decorrelate(W_new)
        similarity = jnp.abs(jnp.diagonal(W_new @ W.T))
        crit = jnp.max(jnp.abs(similarity - 1.0))
        return i + 1, W_new, crit

    def cond(carry):
        i, _, crit = carry
        return jnp.logical_and(i < n_iter, crit >= eps)

    W = _decorrelate(W0)
    _, W, _ = lax.while_loop(cond, body, (jnp.int32(0), W, jnp.float32(jnp.inf)))

    # Per-component energy of the separated signal via the fused Gram matrix:
    # s2 = diag(W G W^T) with G = xq xq^T accumulated in the whitening pass
    # (padded columns contribute exactly 0) — no extra streaming pass.
    # NOTE: the spec's literal code calls self.transform() before self.W is
    # updated; we follow the clearly intended semantics and use the final W.
    s2 = jnp.sum((W @ gram) * W, axis=1, keepdims=True)         # (K, 1)
    W = W / jnp.sqrt(s2 / tT)
    return W


class IndependentComponentAnalysis:
    """JAX/Pallas port of diffsptk's FastICA forward pass."""

    def __init__(self, order, n_comp, func="logcosh", n_iter=100, eps=1e-4,
                 seed=0, tile_t=262144, ncores=None,
                 storage_dtype=jnp.bfloat16):
        assert 1 <= n_comp <= order + 1
        assert 1 <= n_iter
        assert 0 <= eps
        self.order = order
        self.n_comp = n_comp
        self.n_iter = n_iter
        self.eps = float(eps)
        # Lanes of T per grid step (multiple of 128).  Per-step pipeline
        # overhead (~0.35 us) dominates small tiles, so the default is large;
        # forward() further caps it from the running chip's VMEM budget.
        self.tile_t = _round_up(max(int(tile_t), 128), 128)
        # Width of the leading "parallel" grid axis: per-core partials shard
        # the T reduction across both v7x TensorCores; stays 1 on v5e/v6e so no
        # dead serial axis / extra accumulators are created.
        self.ncores = (max(int(ncores), 1) if ncores is not None
                       else _default_ncores())
        # bf16 halves HBM traffic of the streamed x / xq data; all accumulation
        # stays f32 inside the kernels.
        self.storage_dtype = storage_dtype
        if func == "logcosh":
            self.use_gauss = False
        elif func == "gauss":
            self.use_gauss = True
        else:
            raise ValueError(f"func {func} is not supported.")
        # Deterministic random init of the K x K separating matrix.
        self.W = jax.random.normal(jax.random.PRNGKey(seed),
                                   (n_comp, n_comp), dtype=jnp.float32)
        self._mean = None
        self._wh = None

    def forward(self, x):
        """x: (T, M+1) -> separating matrix W: (K, K)."""
        x = jnp.asarray(x)
        T, D = x.shape
        assert D == self.order + 1
        K = self.n_comp
        itemsize = jnp.dtype(self.storage_dtype).itemsize

        # Generation-aware tile cap: keep the whiten kernel's double-buffered
        # working set (~2*(D+K)*tile_t*itemsize) well inside physical VMEM
        # (64 MiB on v7x, 128 MiB on v5e/v6e).
        vmem_total = _tpu_vmem_bytes()
        budget = min(int(0.35 * vmem_total), 48 << 20)
        cap = max((budget // (2 * (D + K) * itemsize)) // 128 * 128, 128)
        # Also never exceed the (padded) per-core share so every core gets work.
        tile = min(self.tile_t, cap,
                   _round_up(max(_cdiv(T, self.ncores), 128), 128))
        Tp = _round_up(T, self.ncores * tile)      # pad so the grid is exact
        n_pad = Tp - T
        vmem_limit = int(max(min(int(0.7 * vmem_total), 100 << 20), 32 << 20))

        # One-time zero-pad + cast + transpose: T lands on the lane axis.
        xT = jnp.swapaxes(
            jnp.pad(x.astype(self.storage_dtype), ((0, n_pad), (0, 0))), 0, 1)
        # Shift constant (first sample) for numerically-safe covariance.
        c = x[0].astype(jnp.float32).reshape(D, 1)

        xqT, gram, mean, wh = _pca_whiten(
            xT, c, t_true=T, n_pad=n_pad, n_comp=K, tile_t=tile,
            ncores=self.ncores, out_dtype=self.storage_dtype,
            vmem_limit=vmem_limit)
        W = _run_fastica(xqT, gram, self.W, t_true=T, n_pad=n_pad,
                         n_iter=self.n_iter, eps=self.eps,
                         use_gauss=self.use_gauss, tile_t=tile,
                         ncores=self.ncores, vmem_limit=vmem_limit)
        self.W = W
        self._mean = mean    # (D, 1)
        self._wh = wh        # (D, K)
        return W

    __call__ = forward

    def transform(self, x):
        """Separate input vectors into independent components: (..., M+1) -> (..., K)."""
        return ((jnp.asarray(x) - self._mean[:, 0]) @ self._wh) @ self.W.T


if __name__ == "__main__":
    key = jax.random.PRNGKey(0)
    k_src, k_mix, k_noise = jax.random.split(key, 3)

    T = 512          # number of input vectors
    order = 7        # M  -> D = M + 1 = 8
    n_comp = 4       # K

    # Synthetic mixed observations: x = S A^T + noise, S: (T, K) sources.
    S = jnp.tanh(jax.random.normal(k_src, (T, n_comp), dtype=jnp.float32) * 2.0)
    A = jax.random.normal(k_mix, (order + 1, n_comp), dtype=jnp.float32)
    x = S @ A.T + 0.01 * jax.random.normal(k_noise, (T, order + 1),
                                           dtype=jnp.float32)

    ica = IndependentComponentAnalysis(order, n_comp, func="logcosh",
                                       n_iter=30, eps=1e-4, seed=0)
    W = ica(x)
    W = jax.block_until_ready(W)
    assert W.shape == (n_comp, n_comp)
    assert bool(jnp.all(jnp.isfinite(W)))

    # Light end-to-end checks against plain JAX (tolerances account for bf16
    # storage of the streamed data; accumulation is f32).
    np.testing.assert_allclose(np.asarray(ica._mean[:, 0]),
                               np.asarray(jnp.mean(x, axis=0)),
                               rtol=1e-2, atol=5e-3)
    # After the final normalization the separated components have (uncentered)
    # unit variance — exercises the whitening kernel, the fused Gram s2 path,
    # and the FastICA stats kernel.
    s = ica.transform(x)
    np.testing.assert_allclose(np.asarray(jnp.mean(s * s, axis=0)),
                               np.ones(n_comp), rtol=2e-2, atol=2e-2)

    print("KERNEL_OK")
</pallas_src>

<mosaic_0001>
module attributes {stable_mosaic.version = 11 : i64} {
  func.func @_moments_kernel(%arg0: i32, %arg1: i32, %arg2: memref<8x512xbf16, #tpu.memory_space<vmem>>, %arg3: memref<8x1xf32, #tpu.memory_space<vmem>>, %arg4: memref<1x8x1xf32, #tpu.memory_space<vmem>>, %arg5: memref<1x8x8xf32, #tpu.memory_space<vmem>>) attributes {dimension_semantics = [#tpu.dimension_semantics<parallel>, #tpu.dimension_semantics<arbitrary>], iteration_bounds = array<i64: 1, 1>, scalar_prefetch = 0 : i64, scratch_operands = 0 : i64, tpu.core_type = #tpu.core_type<tc>, window_params = [{transform_indices = @transform_0, window_bounds = array<i64: 8, 512>}, {pipeline_mode = #tpu.pipeline_mode<synchronous>, transform_indices = @transform_1, window_bounds = array<i64: 8, 1>}, {transform_indices = @transform_2, window_bounds = array<i64: 1, 8, 1>}, {transform_indices = @transform_3, window_bounds = array<i64: 1, 8, 8>}]} {
    %c0_i32 = arith.constant 0 : i32
    %0 = arith.cmpi eq, %arg1, %c0_i32 : i32
    %1 = arith.extui %0 : i1 to i32
    %c0_i32_0 = arith.constant 0 : i32
    %2 = arith.cmpi ne, %1, %c0_i32_0 : i32
    scf.if %2 {
      %cst_17 = arith.constant 0.000000e+00 : f32
      %23 = vector.broadcast %cst_17 : f32 to vector<1x8x1xf32>
      %c0_18 = arith.constant 0 : index
      %c0_19 = arith.constant 0 : index
      %c0_20 = arith.constant 0 : index
      %24 = vector.load %arg4[%c0_18, %c0_19, %c0_20] : memref<1x8x1xf32, #tpu.memory_space<vmem>>, vector<1x8x1xf32>
      tpu.vector_store %arg4[%c0_18, %c0_19, %c0_20], %23 {strides = array<i32>} : memref<1x8x1xf32, #tpu.memory_space<vmem>>, vector<1x8x1xf32>,
      %cst_21 = arith.constant 0.000000e+00 : f32
      %25 = vector.broadcast %cst_21 : f32 to vector<1x8x8xf32>
      %c0_22 = arith.constant 0 : index
      %c0_23 = arith.constant 0 : index
      %c0_24 = arith.constant 0 : index
      %26 = vector.load %arg5[%c0_22, %c0_23, %c0_24] : memref<1x8x8xf32, #tpu.memory_space<vmem>>, vector<1x8x8xf32>
      tpu.vector_store %arg5[%c0_22, %c0_23, %c0_24], %25 {strides = array<i32>} : memref<1x8x8xf32, #tpu.memory_space<vmem>>, vector<1x8x8xf32>,
    } else {
    }
    %c0 = arith.constant 0 : index
    %c0_1 = arith.constant 0 : index
    %3 = vector.load %arg2[%c0, %c0_1] : memref<8x512xbf16, #tpu.memory_space<vmem>>, vector<8x512xbf16>
    %4 = arith.extf %3 : vector<8x512xbf16> to vector<8x512xf32>
    %c0_2 = arith.constant 0 : index
    %c0_3 = arith.constant 0 : index
    %5 = vector.load %arg3[%c0_2, %c0_3] : memref<8x1xf32, #tpu.memory_space<vmem>>, vector<8x1xf32>
    %6 = vector.broadcast %5 : vector<8x1xf32> to vector<8x512xf32>
    %7 = arith.subf %4, %6 : vector<8x512xf32>
    %c0_4 = arith.constant 0 : index
    %c0_5 = arith.constant 0 : index
    %c0_6 = arith.constant 0 : index
    %8 = vector.load %arg4[%c0_4, %c0_5, %c0_6] : memref<1x8x1xf32, #tpu.memory_space<vmem>>, vector<1x8x1xf32>
    %9 = vector.shape_cast %8 : vector<1x8x1xf32> to vector<8x1xf32>
    %cst = arith.constant dense<0.000000e+00> : vector<8xf32>
    %10 = vector.multi_reduction <add>, %7, %cst [1] : vector<8x512xf32> to vector<8xf32>
    %11 = vector.shape_cast %10 : vector<8xf32> to vector<8x1xf32>
    %12 = arith.addf %9, %11 : vector<8x1xf32>
    %c0_7 = arith.constant 0 : index
    %c0_8 = arith.constant 0 : index
    %c0_9 = arith.constant 0 : index
    %13 = vector.load %arg4[%c0_7, %c0_8, %c0_9] : memref<1x8x1xf32, #tpu.memory_space<vmem>>, vector<1x8x1xf32>
    %14 = vector.shape_cast %13 : vector<1x8x1xf32> to vector<8x1xf32>
    %15 = vector.shape_cast %12 : vector<8x1xf32> to vector<1x8x1xf32>
    tpu.vector_store %arg4[%c0_7, %c0_8, %c0_9], %15 {strides = array<i32>} : memref<1x8x1xf32, #tpu.memory_space<vmem>>, vector<1x8x1xf32>,
    %c0_10 = arith.constant 0 : index
    %c0_11 = arith.constant 0 : index
    %c0_12 = arith.constant 0 : index
    %16 = vector.load %arg5[%c0_10, %c0_11, %c0_12] : memref<1x8x8xf32, #tpu.memory_space<vmem>>, vector<1x8x8xf32>
    %17 = vector.shape_cast %16 : vector<1x8x8xf32> to vector<8x8xf32>
    %cst_13 = arith.constant dense<0.000000e+00> : vector<8x8xf32>
    %18 = tpu.matmul %7, %7, %cst_13 {dimension_numbers = #tpu.dot_dimension_numbers<[1], [1], [0], [0], [0, 0, 1, 0], [], []>} : vector<8x512xf32>, vector<8x512xf32>, vector<8x8xf32> -> vector<8x8xf32>
    %19 = arith.addf %17, %18 : vector<8x8xf32>
    %c0_14 = arith.constant 0 : index
    %c0_15 = arith.constant 0 : index
    %c0_16 = arith.constant 0 : index
    %20 = vector.load %arg5[%c0_14, %c0_15, %c0_16] : memref<1x8x8xf32, #tpu.memory_space<vmem>>, vector<1x8x8xf32>
    %21 = vector.shape_cast %20 : vector<1x8x8xf32> to vector<8x8xf32>
    %22 = vector.shape_cast %19 : vector<8x8xf32> to vector<1x8x8xf32>
    tpu.vector_store %arg5[%c0_14, %c0_15, %c0_16], %22 {strides = array<i32>} : memref<1x8x8xf32, #tpu.memory_space<vmem>>, vector<1x8x8xf32>,
    return
  }
  func.func @transform_0(%arg0: i32, %arg1: i32) -> (i32, i32) {
    %c1_i32 = arith.constant 1 : i32
    %0 = arith.muli %arg0, %c1_i32 : i32
    %1 = arith.addi %0, %arg1 : i32
    %c0_i32 = arith.constant 0 : i32
    %c0_i32_0 = arith.constant 0 : i32
    return %c0_i32, %1 : i32, i32
  }
  func.func @transform_1(%arg0: i32, %arg1: i32) -> (i32, i32) {
    %c0_i32 = arith.constant 0 : i32
    %c0_i32_0 = arith.constant 0 : i32
    %c0_i32_1 = arith.constant 0 : i32
    return %c0_i32, %c0_i32_0 : i32, i32
  }
  func.func @transform_2(%arg0: i32, %arg1: i32) -> (i32, i32, i32) {
    %c0_i32 = arith.constant 0 : i32
    %c0_i32_0 = arith.constant 0 : i32
    %c0_i32_1 = arith.constant 0 : i32
    return %arg0, %c0_i32, %c0_i32_0 : i32, i32, i32
  }
  func.func @transform_3(%arg0: i32, %arg1: i32) -> (i32, i32, i32) {
    %c0_i32 = arith.constant 0 : i32
    %c0_i32_0 = arith.constant 0 : i32
    %c0_i32_1 = arith.constant 0 : i32
    return %arg0, %c0_i32, %c0_i32_0 : i32, i32, i32
  }
}

module attributes {stable_mosaic.version = 11 : i64} {
  func.func @_whiten_kernel(%arg0: i32, %arg1: i32, %arg2: memref<8x512xbf16, #tpu.memory_space<vmem>>, %arg3: memref<8x1xf32, #tpu.memory_space<vmem>>, %arg4: memref<4x8xf32, #tpu.memory_space<vmem>>, %arg5: memref<4x512xbf16, #tpu.memory_space<vmem>>, %arg6: memref<1x4x4xf32, #tpu.memory_space<vmem>>) attributes {dimension_semantics = [#tpu.dimension_semantics<parallel>, #tpu.dimension_semantics<arbitrary>], iteration_bounds = array<i64: 1, 1>, scalar_prefetch = 0 : i64, scratch_operands = 0 : i64, tpu.core_type = #tpu.core_type<tc>, window_params = [{transform_indices = @transform_0, window_bounds = array<i64: 8, 512>}, {pipeline_mode = #tpu.pipeline_mode<synchronous>, transform_indices = @transform_1, window_bounds = array<i64: 8, 1>}, {pipeline_mode = #tpu.pipeline_mode<synchronous>, transform_indices = @transform_2, window_bounds = array<i64: 4, 8>}, {transform_indices = @transform_3, window_bounds = array<i64: 4, 512>}, {transform_indices = @transform_4, window_bounds = array<i64: 1, 4, 4>}]} {
    %c0_i32 = arith.constant 0 : i32
    %0 = arith.cmpi eq, %arg1, %c0_i32 : i32
    %1 = arith.extui %0 : i1 to i32
    %c0_i32_0 = arith.constant 0 : i32
    %2 = arith.cmpi ne, %1, %c0_i32_0 : i32
    scf.if %2 {
      %cst_17 = arith.constant 0.000000e+00 : f32
      %29 = vector.broadcast %cst_17 : f32 to vector<1x4x4xf32>
      %c0_18 = arith.constant 0 : index
      %c0_19 = arith.constant 0 : index
      %c0_20 = arith.constant 0 : index
      %30 = vector.load %arg6[%c0_18, %c0_19, %c0_20] : memref<1x4x4xf32, #tpu.memory_space<vmem>>, vector<1x4x4xf32>
      tpu.vector_store %arg6[%c0_18, %c0_19, %c0_20], %29 {strides = array<i32>} : memref<1x4x4xf32, #tpu.memory_space<vmem>>, vector<1x4x4xf32>,
    } else {
    }
    %c1_i32 = arith.constant 1 : i32
    %3 = arith.muli %arg0, %c1_i32 : i32
    %4 = arith.addi %3, %arg1 : i32
    %c512_i32 = arith.constant 512 : i32
    %5 = arith.muli %4, %c512_i32 : i32
    %c0 = arith.constant 0 : index
    %c0_1 = arith.constant 0 : index
    %6 = vector.load %arg2[%c0, %c0_1] : memref<8x512xbf16, #tpu.memory_space<vmem>>, vector<8x512xbf16>
    %7 = arith.extf %6 : vector<8x512xbf16> to vector<8x512xf32>
    %8 = tpu.iota {dimensions = array<i32: 1>} : vector<8x512xi32>
    %9 = vector.broadcast %5 : i32 to vector<8x512xi32>
    %10 = arith.addi %9, %8 : vector<8x512xi32>
    %c512_i32_2 = arith.constant 512 : i32
    %11 = vector.broadcast %c512_i32_2 : i32 to vector<8x512xi32>
    %12 = arith.cmpi slt, %10, %11 : vector<8x512xi32>
    %c0_3 = arith.constant 0 : index
    %c0_4 = arith.constant 0 : index
    %13 = vector.load %arg3[%c0_3, %c0_4] : memref<8x1xf32, #tpu.memory_space<vmem>>, vector<8x1xf32>
    %14 = vector.broadcast %13 : vector<8x1xf32> to vector<8x512xf32>
    %15 = arith.subf %7, %14 : vector<8x512xf32>
    %cst = arith.constant 0.000000e+00 : f32
    %16 = vector.broadcast %cst : f32 to vector<8x512xf32>
    %17 = arith.select %12, %15, %16 : vector<8x512xi1>, vector<8x512xf32>
    %c0_5 = arith.constant 0 : index
    %c0_6 = arith.constant 0 : index
    %18 = vector.load %arg4[%c0_5, %c0_6] : memref<4x8xf32, #tpu.memory_space<vmem>>, vector<4x8xf32>
    %cst_7 = arith.constant dense<0.000000e+00> : vector<4x512xf32>
    %19 = tpu.matmul %18, %17, %cst_7 {dimension_numbers = #tpu.dot_dimension_numbers<[1], [0], [0], [1], [0, 0, 1, 1], [], []>} : vector<4x8xf32>, vector<8x512xf32>, vector<4x512xf32> -> vector<4x512xf32>
    %20 = arith.truncf %19 : vector<4x512xf32> to vector<4x512xbf16>
    %c0_8 = arith.constant 0 : index
    %c0_9 = arith.constant 0 : index
    %21 = vector.load %arg5[%c0_8, %c0_9] : memref<4x512xbf16, #tpu.memory_space<vmem>>, vector<4x512xbf16>
    tpu.vector_store %arg5[%c0_8, %c0_9], %20 {strides = array<i32>} : memref<4x512xbf16, #tpu.memory_space<vmem>>, vector<4x512xbf16>,
    %c0_10 = arith.constant 0 : index
    %c0_11 = arith.constant 0 : index
    %c0_12 = arith.constant 0 : index
    %22 = vector.load %arg6[%c0_10, %c0_11, %c0_12] : memref<1x4x4xf32, #tpu.memory_space<vmem>>, vector<1x4x4xf32>
    %23 = vector.shape_cast %22 : vector<1x4x4xf32> to vector<4x4xf32>
    %cst_13 = arith.constant dense<0.000000e+00> : vector<4x4xf32>
    %24 = tpu.matmul %19, %19, %cst_13 {dimension_numbers = #tpu.dot_dimension_numbers<[1], [1], [0], [0], [0, 0, 1, 0], [], []>} : vector<4x512xf32>, vector<4x512xf32>, vector<4x4xf32> -> vector<4x4xf32>
    %25 = arith.addf %23, %24 : vector<4x4xf32>
    %c0_14 = arith.constant 0 : index
    %c0_15 = arith.constant 0 : index
    %c0_16 = arith.constant 0 : index
    %26 = vector.load %arg6[%c0_14, %c0_15, %c0_16] : memref<1x4x4xf32, #tpu.memory_space<vmem>>, vector<1x4x4xf32>
    %27 = vector.shape_cast %26 : vector<1x4x4xf32> to vector<4x4xf32>
    %28 = vector.shape_cast %25 : vector<4x4xf32> to vector<1x4x4xf32>
    tpu.vector_store %arg6[%c0_14, %c0_15, %c0_16], %28 {strides = array<i32>} : memref<1x4x4xf32, #tpu.memory_space<vmem>>, vector<1x4x4xf32>,
    return
  }
  func.func @transform_0(%arg0: i32, %arg1: i32) -> (i32, i32) {
    %c1_i32 = arith.constant 1 : i32
    %0 = arith.muli %arg0, %c1_i32 : i32
    %1 = arith.addi %0, %arg1 : i32
    %c0_i32 = arith.constant 0 : i32
    %c0_i32_0 = arith.constant 0 : i32
    return %c0_i32, %1 : i32, i32
  }
  func.func @transform_1(%arg0: i32, %arg1: i32) -> (i32, i32) {
    %c0_i32 = arith.constant 0 : i32
    %c0_i32_0 = arith.constant 0 : i32
    %c0_i32_1 = arith.constant 0 : i32
    return %c0_i32, %c0_i32_0 : i32, i32
  }
  func.func @transform_2(%arg0: i32, %arg1: i32) -> (i32, i32) {
    %c0_i32 = arith.constant 0 : i32
    %c0_i32_0 = arith.constant 0 : i32
    %c0_i32_1 = arith.constant 0 : i32
    return %c0_i32, %c0_i32_0 : i32, i32
  }
  func.func @transform_3(%arg0: i32, %arg1: i32) -> (i32, i32) {
    %c1_i32 = arith.constant 1 : i32
    %0 = arith.muli %arg0, %c1_i32 : i32
    %1 = arith.addi %0, %arg1 : i32
    %c0_i32 = arith.constant 0 : i32
    %c0_i32_0 = arith.constant 0 : i32
    return %c0_i32, %1 : i32, i32
  }
  func.func @transform_4(%arg0: i32, %arg1: i32) -> (i32, i32, i32) {
    %c0_i32 = arith.constant 0 : i32
    %c0_i32_0 = arith.constant 0 : i32
    %c0_i32_1 = arith.constant 0 : i32
    return %arg0, %c0_i32, %c0_i32_0 : i32, i32, i32
  }
}

</mosaic_0001>

<llo_original>
// kernel: custom-call.2
$region0: #{custom-call.2}
  %s0 = inlined_call_operand.vmem [shape: f32[4,4], index: 0, kind: input, shape index: {}]
  %s1 = inlined_call_operand.vmem [shape: f32[4,4], index: 1, kind: input, shape index: {}]
  %s2 = inlined_call_operand.vmem [shape: f32[4,4], index: 2, kind: input, shape index: {}]
  %s3 = inlined_call_operand.vmem [shape: f32[4,4], index: 3, kind: input, shape index: {}]
  %s4 = inlined_call_operand.vmem [shape: f32[4], index: 4, kind: output, shape index: {0}]
  %s5 = inlined_call_operand.vmem [shape: f32[4], index: 5, kind: output, shape index: {1}]
  %s6 = inlined_call_operand.vmem [shape: f32[4,4], index: 6, kind: output, shape index: {2}]
  %s7 = inlined_call_operand.vmem [shape: f32[4,4], index: 7, kind: output, shape index: {3}]
  %s8 = inlined_call_operand.vmem [shape: f32[4,4], index: 8, kind: output, shape index: {4}]
  %s9 = inlined_call_operand.vmem [shape: f32[4,4], index: 9, kind: output, shape index: {5}]
  %10 = xla_tuple %s4, %s5, %s6, %s7, %s8, %s9
  $region1: #{custom-call.2} parent=0
    #allocation0 [shape = 'u8[4096]{0}', space=vmem, size = 0x1000, scoped, tag = 'operand span for operand 0']
    #allocation1 [shape = 'u8[2048]{0}', space=vmem, size = 0x800, scoped, tag = 'packed  for operand 0']
    #allocation2 [shape = 'u8[4096]{0}', space=vmem, size = 0x1000, scoped, tag = 'operand span for operand 1']
    #allocation3 [shape = 'u8[2048]{0}', space=vmem, size = 0x800, scoped, tag = 'packed  for operand 1']
    #allocation4 [shape = 'u8[4096]{0}', space=vmem, size = 0x1000, scoped, tag = 'operand span for operand 2']
    #allocation5 [shape = 'u8[2048]{0}', space=vmem, size = 0x800, scoped, tag = 'packed  for operand 2']
    #allocation6 [shape = 'u8[4096]{0}', space=vmem, size = 0x1000, scoped, tag = 'operand span for operand 3']
    #allocation7 [shape = 'u8[2048]{0}', space=vmem, size = 0x800, scoped, tag = 'packed  for operand 3']
    #allocation8 [shape = 'u8[4096]{0}', space=vmem, size = 0x1000, scoped, tag = 'operand span for operand 4']
    #allocation9 [shape = 'u8[512]{0}', space=vmem, size = 0x400, scoped, tag = 'packed  for operand 4']
    #allocation10 [shape = 'u8[4096]{0}', space=vmem, size = 0x1000, scoped, tag = 'operand span for operand 5']
    #allocation11 [shape = 'u8[512]{0}', space=vmem, size = 0x400, scoped, tag = 'packed  for operand 5']
    #allocation12 [shape = 'u8[4096]{0}', space=vmem, size = 0x1000, scoped, tag = 'operand span for operand 6']
    #allocation13 [shape = 'u8[2048]{0}', space=vmem, size = 0x800, scoped, tag = 'packed  for operand 6']
    #allocation14 [shape = 'u8[4096]{0}', space=vmem, size = 0x1000, scoped, tag = 'operand span for operand 7']
    #allocation15 [shape = 'u8[2048]{0}', space=vmem, size = 0x800, scoped, tag = 'packed  for operand 7']
    #allocation16 [shape = 'u8[4096]{0}', space=vmem, size = 0x1000, scoped, tag = 'operand span for operand 8']
    #allocation17 [shape = 'u8[2048]{0}', space=vmem, size = 0x800, scoped, tag = 'packed  for operand 8']
    #allocation18 [shape = 'u8[4096]{0}', space=vmem, size = 0x1000, scoped, tag = 'operand span for operand 9']
    #allocation19 [shape = 'u8[2048]{0}', space=vmem, size = 0x800, scoped, tag = 'packed  for operand 9']
    #allocation20 [shape = 'f32[4,4]{1,0}', space=vmem, size = 0x1000, scoped, tag = 'a top-left matrix']
    #allocation21 [shape = 'f32[4,4]{1,0}', space=vmem, size = 0x1000, scoped, tag = 'a top-right matrix']
    #allocation22 [shape = 'f32[4,4]{1,0}', space=vmem, size = 0x1000, scoped, tag = 'a bottom-left matrix']
    #allocation23 [shape = 'f32[4,4]{1,0}', space=vmem, size = 0x1000, scoped, tag = 'a bottom-right matrix']
    // Predicated region
    $region2: #{custom-call.2} parent=1 // pred_check
      _
    $region3: #{custom-call.2} parent=1 // pred_check_branch
      %12 = sbr.rel (0) target = $region5
    $region4: #{custom-call.2} parent=1 // pred_region
      %p14 = scmp.gt.s32.totalorder 0, 0
      // Predicated region
      $region6: #{custom-call.2} parent=4 // pred_check
        %p15 = pneg %p14
      $region7: #{custom-call.2} parent=4 // pred_check_branch
        %17 = sbr.rel (%p15) target = $region9
      $region8: #{custom-call.2} parent=4 // pred_region
        %s18 = ssub.s32 0, 1
        %s19 = smul.u32 %s18, 8
        %s20 = scalar_lea.vmem %s0, %s19
        %v21 = vld [vmem:[%s0] sm:$0xff]
        // While loop
        $region10: #{custom-call.2} parent=8 // loop_pre_header
          _
        $region11: #{custom-call.2} parent=8 // loop_header
          %s22 = sphi %s0, %s44
          %s23 = sphi [#allocation1], %s45
          %v24 = vphi %v21, %v46
          %s25 = ssub.s32 %s20, 64
          %p26 = scmp.gt.s32.totalorder %s22, %s25
        $region12: #{custom-call.2} parent=8 // loop_header_branch
          %28 = sbr.rel (%p26) target = $region16
        $region13: #{custom-call.2} parent=8 // loop_body
          %29 = vst [vmem:[%s23] sm:$0xff] %v24
          %v30 = vld [vmem:[%s22 + $0x8] sm:$0xff]
          %31 = vst [vmem:[%s23 + $0x8] sm:$0xff] %v30
          %v32 = vld [vmem:[%s22 + $0x10] sm:$0xff]
          %33 = vst [vmem:[%s23 + $0x10] sm:$0xff] %v32
          %v34 = vld [vmem:[%s22 + $0x18] sm:$0xff]
          %35 = vst [vmem:[%s23 + $0x18] sm:$0xff] %v34
          %v36 = vld [vmem:[%s22 + $0x20] sm:$0xff]
          %37 = vst [vmem:[%s23 + $0x20] sm:$0xff] %v36
          %v38 = vld [vmem:[%s22 + $0x28] sm:$0xff]
          %39 = vst [vmem:[%s23 + $0x28] sm:$0xff] %v38
          %v40 = vld [vmem:[%s22 + $0x30] sm:$0xff]
          %41 = vst [vmem:[%s23 + $0x30] sm:$0xff] %v40
          %v42 = vld [vmem:[%s22 + $0x38] sm:$0xff]
          %43 = vst [vmem:[%s23 + $0x38] sm:$0xff] %v42
        $region14: #{custom-call.2} parent=8 // loop_footer
          %s44 = scalar_lea.vmem %s22, 64
          %s45 = scalar_lea.vmem %s23, 64
          %v46 = vld [vmem:[%s22 + $0x40] sm:$0xff]
        $region15: #{custom-call.2} parent=8 // loop_footer_branch
          %47 = sbr.rel target = $region11
        $region16: #{custom-call.2} parent=8 // loop_exit
          _
        // While loop
        $region17: #{custom-call.2} parent=8 // loop_pre_header
          _
        $region18: #{custom-call.2} parent=8 // loop_header
          %s48 = sphi %s22, %s56
          %s49 = sphi %s23, %s57
          %v50 = vphi %v24, %v50
          %p51 = scmp.gt.s32.totalorder %s48, %s20
        $region19: #{custom-call.2} parent=8 // loop_header_branch
          %53 = sbr.rel (%p51) target = $region23
        $region20: #{custom-call.2} parent=8 // loop_body
          %v54 = vld [vmem:[%s48] sm:$0xff]
          %55 = vst [vmem:[%s49] sm:$0xff] %v54
        $region21: #{custom-call.2} parent=8 // loop_footer
          %s56 = scalar_lea.vmem %s48, 8
          %s57 = scalar_lea.vmem %s49, 8
        $region22: #{custom-call.2} parent=8 // loop_footer_branch
          %58 = sbr.rel target = $region18
        $region23: #{custom-call.2} parent=8 // loop_exit
          _
      $region9: #{custom-call.2} parent=4 // pred_fallthru
        _
      %s60 = ssub.s32 16, 1
      %s61 = smul.u32 0, 8
      %s62 = scalar_lea.vmem [#allocation1], %s61
      %s63 = smul.u32 0, 8
      %s64 = scalar_lea.vmem %s0, %s63
      %v65 = vld [vmem:[%s64] sm:%s60]
      %66 = vst [vmem:[%s62] sm:%s60] %v65
    $region5: #{custom-call.2} parent=1 // pred_fallthru
      _
    // Predicated region
    $region24: #{custom-call.2} parent=1 // pred_check
      _
    $region25: #{custom-call.2} parent=1 // pred_check_branch
      %68 = sbr.rel (0) target = $region27
    $region26: #{custom-call.2} parent=1 // pred_region
      %p70 = scmp.gt.s32.totalorder 0, 0
      // Predicated region
      $region28: #{custom-call.2} parent=26 // pred_check
        %p71 = pneg %p70
      $region29: #{custom-call.2} parent=26 // pred_check_branch
        %73 = sbr.rel (%p71) target = $region31
      $region30: #{custom-call.2} parent=26 // pred_region
        %s74 = ssub.s32 0, 1
        %s75 = smul.u32 %s74, 8
        %s76 = scalar_lea.vmem %s1, %s75
        %v77 = vld [vmem:[%s1] sm:$0xff]
        // While loop
        $region32: #{custom-call.2} parent=30 // loop_pre_header
          _
        $region33: #{custom-call.2} parent=30 // loop_header
          %s78 = sphi %s1, %s100
          %s79 = sphi [#allocation3], %s101
          %v80 = vphi %v77, %v102
          %s81 = ssub.s32 %s76, 64
          %p82 = scmp.gt.s32.totalorder %s78, %s81
        $region34: #{custom-call.2} parent=30 // loop_header_branch
          %84 = sbr.rel (%p82) target = $region38
        $region35: #{custom-call.2} parent=30 // loop_body
          %85 = vst [vmem:[%s79] sm:$0xff] %v80
          %v86 = vld [vmem:[%s78 + $0x8] sm:$0xff]
          %87 = vst [vmem:[%s79 + $0x8] sm:$0xff] %v86
          %v88 = vld [vmem:[%s78 + $0x10] sm:$0xff]
          %89 = vst [vmem:[%s79 + $0x10] sm:$0xff] %v88
          %v90 = vld [vmem:[%s78 + $0x18] sm:$0xff]
          %91 = vst [vmem:[%s79 + $0x18] sm:$0xff] %v90
          %v92 = vld [vmem:[%s78 + $0x20] sm:$0xff]
          %93 = vst [vmem:[%s79 + $0x20] sm:$0xff] %v92
          %v94 = vld [vmem:[%s78 + $0x28] sm:$0xff]
          %95 = vst [vmem:[%s79 + $0x28] sm:$0xff] %v94
          %v96 = vld [vmem:[%s78 + $0x30] sm:$0xff]
          %97 = vst [vmem:[%s79 + $0x30] sm:$0xff] %v96
          %v98 = vld [vmem:[%s78 + $0x38] sm:$0xff]
          %99 = vst [vmem:[%s79 + $0x38] sm:$0xff] %v98
        $region36: #{custom-call.2} parent=30 // loop_footer
          %s100 = scalar_lea.vmem %s78, 64
          %s101 = scalar_lea.vmem %s79, 64
          %v102 = vld [vmem:[%s78 + $0x40] sm:$0xff]
        $region37: #{custom-call.2} parent=30 // loop_footer_branch
          %103 = sbr.rel target = $region33
        $region38: #{custom-call.2} parent=30 // loop_exit
          _
        // While loop
        $region39: #{custom-call.2} parent=30 // loop_pre_header
          _
        $region40: #{custom-call.2} parent=30 // loop_header
          %s104 = sphi %s78, %s112
          %s105 = sphi %s79, %s113
          %v106 = vphi %v80, %v106
          %p107 = scmp.gt.s32.totalorder %s104, %s76
        $region41: #{custom-call.2} parent=30 // loop_header_branch
          %109 = sbr.rel (%p107) target = $region45
        $region42: #{custom-call.2} parent=30 // loop_body
          %v110 = vld [vmem:[%s104] sm:$0xff]
          %111 = vst [vmem:[%s105] sm:$0xff] %v110
        $region43: #{custom-call.2} parent=30 // loop_footer
          %s112 = scalar_lea.vmem %s104, 8
          %s113 = scalar_lea.vmem %s105, 8
        $region44: #{custom-call.2} parent=30 // loop_footer_branch
          %114 = sbr.rel target = $region40
        $region45: #{custom-call.2} parent=30 // loop_exit
          _
      $region31: #{custom-call.2} parent=26 // pred_fallthru
        _
      %s116 = ssub.s32 16, 1
      %s117 = smul.u32 0, 8
      %s118 = scalar_lea.vmem [#allocation3], %s117
      %s119 = smul.u32 0, 8
      %s120 = scalar_lea.vmem %s1, %s119
      %v121 = vld [vmem:[%s120] sm:%s116]
      %122 = vst [vmem:[%s118] sm:%s116] %v121
    $region27: #{custom-call.2} parent=1 // pred_fallthru
      _
    // Predicated region
    $region46: #{custom-call.2} parent=1 // pred_check
      _
    $region47: #{custom-call.2} parent=1 // pred_check_branch
      %124 = sbr.rel (0) target = $region49
    $region48: #{custom-call.2} parent=1 // pred_region
      %p126 = scmp.gt.s32.totalorder 0, 0
      // Predicated region
      $region50: #{custom-call.2} parent=48 // pred_check
        %p127 = pneg %p126
      $region51: #{custom-call.2} parent=48 // pred_check_branch
        %129 = sbr.rel (%p127) target = $region53
      $region52: #{custom-call.2} parent=48 // pred_region
        %s130 = ssub.s32 0, 1
        %s131 = smul.u32 %s130, 8
        %s132 = scalar_lea.vmem %s2, %s131
        %v133 = vld [vmem:[%s2] sm:$0xff]
        // While loop
        $region54: #{custom-call.2} parent=52 // loop_pre_header
          _
        $region55: #{custom-call.2} parent=52 // loop_header
          %s134 = sphi %s2, %s156
          %s135 = sphi [#allocation5], %s157
          %v136 = vphi %v133, %v158
          %s137 = ssub.s32 %s132, 64
          %p138 = scmp.gt.s32.totalorder %s134, %s137
        $region56: #{custom-call.2} parent=52 // loop_header_branch
          %140 = sbr.rel (%p138) target = $region60
        $region57: #{custom-call.2} parent=52 // loop_body
          %141 = vst [vmem:[%s135] sm:$0xff] %v136
          %v142 = vld [vmem:[%s134 + $0x8] sm:$0xff]
          %143 = vst [vmem:[%s135 + $0x8] sm:$0xff] %v142
          %v144 = vld [vmem:[%s134 + $0x10] sm:$0xff]
          %145 = vst [vmem:[%s135 + $0x10] sm:$0xff] %v144
          %v146 = vld [vmem:[%s134 + $0x18] sm:$0xff]
          %147 = vst [vmem:[%s135 + $0x18] sm:$0xff] %v146
          %v148 = vld [vmem:[%s134 + $0x20] sm:$0xff]
          %149 = vst [vmem:[%s135 + $0x20] sm:$0xff] %v148
          %v150 = vld [vmem:[%s134 + $0x28] sm:$0xff]
          %151 = vst [vmem:[%s135 + $0x28] sm:$0xff] %v150
          %v152 = vld [vmem:[%s134 + $0x30] sm:$0xff]
          %153 = vst [vmem:[%s135 + $0x30] sm:$0xff] %v152
          %v154 = vld [vmem:[%s134 + $0x38] sm:$0xff]
          %155 = vst [vmem:[%s135 + $0x38] sm:$0xff] %v154
        $region58: #{custom-call.2} parent=52 // loop_footer
          %s156 = scalar_lea.vmem %s134, 64
          %s157 = scalar_lea.vmem %s135, 64
          %v158 = vld [vmem:[%s134 + $0x40] sm:$0xff]
        $region59: #{custom-call.2} parent=52 // loop_footer_branch
          %159 = sbr.rel target = $region55
        $region60: #{custom-call.2} parent=52 // loop_exit
          _
        // While loop
        $region61: #{custom-call.2} parent=52 // loop_pre_header
          _
        $region62: #{custom-call.2} parent=52 // loop_header
          %s160 = sphi %s134, %s168
          %s161 = sphi %s135, %s169
          %v162 = vphi %v136, %v162
          %p163 = scmp.gt.s32.totalorder %s160, %s132
        $region63: #{custom-call.2} parent=52 // loop_header_branch
          %165 = sbr.rel (%p163) target = $region67
        $region64: #{custom-call.2} parent=52 // loop_body
          %v166 = vld [vmem:[%s160] sm:$0xff]
          %167 = vst [vmem:[%s161] sm:$0xff] %v166
        $region65: #{custom-call.2} parent=52 // loop_footer
          %s168 = scalar_lea.vmem %s160, 8
          %s169 = scalar_lea.vmem %s161, 8
        $region66: #{custom-call.2} parent=52 // loop_footer_branch
          %170 = sbr.rel target = $region62
        $region67: #{custom-call.2} parent=52 // loop_exit
          _
      $region53: #{custom-call.2} parent=48 // pred_fallthru
        _
      %s172 = ssub.s32 16, 1
      %s173 = smul.u32 0, 8
      %s174 = scalar_lea.vmem [#allocation5], %s173
      %s175 = smul.u32 0, 8
      %s176 = scalar_lea.vmem %s2, %s175
      %v177 = vld [vmem:[%s176] sm:%s172]
      %178 = vst [vmem:[%s174] sm:%s172] %v177
    $region49: #{custom-call.2} parent=1 // pred_fallthru
      _
    // Predicated region
    $region68: #{custom-call.2} parent=1 // pred_check
      _
    $region69: #{custom-call.2} parent=1 // pred_check_branch
      %180 = sbr.rel (0) target = $region71
    $region70: #{custom-call.2} parent=1 // pred_region
      %p182 = scmp.gt.s32.totalorder 0, 0
      // Predicated region
      $region72: #{custom-call.2} parent=70 // pred_check
        %p183 = pneg %p182
      $region73: #{custom-call.2} parent=70 // pred_check_branch
        %185 = sbr.rel (%p183) target = $region75
      $region74: #{custom-call.2} parent=70 // pred_region
        %s186 = ssub.s32 0, 1
        %s187 = smul.u32 %s186, 8
        %s188 = scalar_lea.vmem %s3, %s187
        %v189 = vld [vmem:[%s3] sm:$0xff]
        // While loop
        $region76: #{custom-call.2} parent=74 // loop_pre_header
          _
        $region77: #{custom-call.2} parent=74 // loop_header
          %s190 = sphi %s3, %s212
          %s191 = sphi [#allocation7], %s213
          %v192 = vphi %v189, %v214
          %s193 = ssub.s32 %s188, 64
          %p194 = scmp.gt.s32.totalorder %s190, %s193
        $region78: #{custom-call.2} parent=74 // loop_header_branch
          %196 = sbr.rel (%p194) target = $region82
        $region79: #{custom-call.2} parent=74 // loop_body
          %197 = vst [vmem:[%s191] sm:$0xff] %v192
          %v198 = vld [vmem:[%s190 + $0x8] sm:$0xff]
          %199 = vst [vmem:[%s191 + $0x8] sm:$0xff] %v198
          %v200 = vld [vmem:[%s190 + $0x10] sm:$0xff]
          %201 = vst [vmem:[%s191 + $0x10] sm:$0xff] %v200
          %v202 = vld [vmem:[%s190 + $0x18] sm:$0xff]
          %203 = vst [vmem:[%s191 + $0x18] sm:$0xff] %v202
          %v204 = vld [vmem:[%s190 + $0x20] sm:$0xff]
          %205 = vst [vmem:[%s191 + $0x20] sm:$0xff] %v204
          %v206 = vld [vmem:[%s190 + $0x28] sm:$0xff]
          %207 = vst [vmem:[%s191 + $0x28] sm:$0xff] %v206
          %v208 = vld [vmem:[%s190 + $0x30] sm:$0xff]
          %209 = vst [vmem:[%s191 + $0x30] sm:$0xff] %v208
          %v210 = vld [vmem:[%s190 + $0x38] sm:$0xff]
          %211 = vst [vmem:[%s191 + $0x38] sm:$0xff] %v210
        $region80: #{custom-call.2} parent=74 // loop_footer
          %s212 = scalar_lea.vmem %s190, 64
          %s213 = scalar_lea.vmem %s191, 64
          %v214 = vld [vmem:[%s190 + $0x40] sm:$0xff]
        $region81: #{custom-call.2} parent=74 // loop_footer_branch
          %215 = sbr.rel target = $region77
        $region82: #{custom-call.2} parent=74 // loop_exit
          _
        // While loop
        $region83: #{custom-call.2} parent=74 // loop_pre_header
          _
        $region84: #{custom-call.2} parent=74 // loop_header
          %s216 = sphi %s190, %s224
          %s217 = sphi %s191, %s225
          %v218 = vphi %v192, %v218
          %p219 = scmp.gt.s32.totalorder %s216, %s188
        $region85: #{custom-call.2} parent=74 // loop_header_branch
          %221 = sbr.rel (%p219) target = $region89
        $region86: #{custom-call.2} parent=74 // loop_body
          %v222 = vld [vmem:[%s216] sm:$0xff]
          %223 = vst [vmem:[%s217] sm:$0xff] %v222
        $region87: #{custom-call.2} parent=74 // loop_footer
          %s224 = scalar_lea.vmem %s216, 8
          %s225 = scalar_lea.vmem %s217, 8
        $region88: #{custom-call.2} parent=74 // loop_footer_branch
          %226 = sbr.rel target = $region84
        $region89: #{custom-call.2} parent=74 // loop_exit
          _
      $region75: #{custom-call.2} parent=70 // pred_fallthru
        _
      %s228 = ssub.s32 16, 1
      %s229 = smul.u32 0, 8
      %s230 = scalar_lea.vmem [#allocation7], %s229
      %s231 = smul.u32 0, 8
      %s232 = scalar_lea.vmem %s3, %s231
      %v233 = vld [vmem:[%s232] sm:%s228]
      %234 = vst [vmem:[%s230] sm:%s228] %v233
    $region71: #{custom-call.2} parent=1 // pred_fallthru
      _
    %s236 = ssub.s32 16, 1
    %v237 = vld [vmem:[#allocation1] sm:%s236]
    %238 = vst [vmem:[#allocation0] sm:%s236] %v237
    %s240 = ssub.s32 16, 1
    %v241 = vld [vmem:[#allocation3] sm:%s240]
    %242 = vst [vmem:[#allocation2] sm:%s240] %v241
    %s244 = ssub.s32 16, 1
    %v245 = vld [vmem:[#allocation5] sm:%s244]
    %246 = vst [vmem:[#allocation4] sm:%s244] %v245
    %s248 = ssub.s32 16, 1
    %v249 = vld [vmem:[#allocation7] sm:%s248]
    %250 = vst [vmem:[#allocation6] sm:%s248] %v249
    %s251 = smov [#allocation20]
    %v252 = vld [vmem:[#allocation0] sm:$0xff]
    %253 = vst [vmem:[%s251] sm:$0xff] %v252
    %s254 = smov [#allocation21]
    %v255 = vld [vmem:[#allocation2] sm:$0xff]
    %256 = vst [vmem:[%s254] sm:$0xff] %v255
    %s257 = smov [#allocation22]
    %v258 = vld [vmem:[#allocation4] sm:$0xff]
    %259 = vst [vmem:[%s257] sm:$0xff] %v258
    %s260 = smov [#allocation23]
    %v261 = vld [vmem:[#allocation6] sm:$0xff]
    %262 = vst [vmem:[%s260] sm:$0xff] %v261
    %263 = vst [vmem:[#allocation12] sm:$0xff] 0.0
    %264 = vst [vmem:[#allocation14] sm:$0xff] 0.0
    %265 = vst [vmem:[#allocation16] sm:$0xff] 0.0
    %266 = vst [vmem:[#allocation18] sm:$0xff] 0.0
    %s267 = smov [#allocation12]
    %v268 = vlaneseq
    %v269 = vand.u32 %v268, 127
    %v270 = vmov %v269
    %v271 = vlaneseq
    %v272 = vshrl.u32 %v271, 7
    %v273 = vmov %v272
    %v274 = vld [vmem:[%s267] sm:$0xf]
    %vm277 = vcmp.eq.s32.totalorder %v273, %v270
    %v278 = vsel %vm277, 1.0, %v274
    %279 = vst [vmem:[%s267] sm:$0xf] %v278
    %s280 = smov [#allocation18]
    %v281 = vlaneseq
    %v282 = vand.u32 %v281, 127
    %v283 = vmov %v282
    %v284 = vlaneseq
    %v285 = vshrl.u32 %v284, 7
    %v286 = vmov %v285
    %v287 = vld [vmem:[%s280] sm:$0xf]
    %vm290 = vcmp.eq.s32.totalorder %v286, %v283
    %v291 = vsel %vm290, 1.0, %v287
    %292 = vst [vmem:[%s280] sm:$0xf] %v291
    // While loop
    $region90: #{custom-call.2} parent=1 // loop_pre_header
      _
    $region91: #{custom-call.2} parent=1 // loop_header
      %s294 = sphi 0, %s876
      %v295 = vlaneseq
      %v296 = vand.u32 %v295, 127
      %v297 = vmov %v296
      %v298 = vlaneseq
      %v299 = vshrl.u32 %v298, 7
      %v300 = vmov %v299
      %s301 = smov [#allocation20]
      %v302 = vlaneseq
      %v303 = vand.u32 %v302, 127
      %vm304 = vcmp.ge.s32.totalorder %v303, 0
      %vm305 = vcmp.lt.s32.totalorder %v303, 4
      %vm306 = vmand %vm304, %vm305
      %v307 = vld [vmem:[%s301] sm:$0xf]
      %v308 = vsel %vm306, %v307, 0.0
      %v309 = vmul.f32 %v308, %v308
      %vm312 = vcmp.eq.s32.totalorder %v300, %v297
      %v313 = vsel %vm312, 0.0, %v309
      %v314 = vlaneseq
      %v315 = vand.u32 %v314, 127
      %v316 = vmov %v315
      %v317 = vlaneseq
      %v318 = vshrl.u32 %v317, 7
      %v319 = vmov %v318
      %s320 = smov [#allocation21]
      %v321 = vlaneseq
      %v322 = vand.u32 %v321, 127
      %vm323 = vcmp.ge.s32.totalorder %v322, 0
      %vm324 = vcmp.lt.s32.totalorder %v322, 4
      %vm325 = vmand %vm323, %vm324
      %v326 = vld [vmem:[%s320] sm:$0xf]
      %v327 = vsel %vm325, %v326, 0.0
      %v328 = vmul.f32 %v327, %v327
      %v329 = vadd.f32 %v313, %v328
      %v330 = vadd.f32 %v309, %v328
      %v331 = vlaneseq
      %v332 = vand.u32 %v331, 127
      %v333 = vmov %v332
      %v334 = vlaneseq
      %v335 = vshrl.u32 %v334, 7
      %v336 = vmov %v335
      %s337 = smov [#allocation22]
      %v338 = vlaneseq
      %v339 = vand.u32 %v338, 127
      %vm340 = vcmp.ge.s32.totalorder %v339, 0
      %vm341 = vcmp.lt.s32.totalorder %v339, 4
      %vm342 = vmand %vm340, %vm341
      %v343 = vld [vmem:[%s337] sm:$0xf]
      %v344 = vsel %vm342, %v343, 0.0
      %v345 = vmul.f32 %v344, %v344
      %v346 = vadd.f32 %v329, %v345
      %v347 = vadd.f32 %v330, %v345
      %v348 = vlaneseq
      %v349 = vand.u32 %v348, 127
      %v350 = vmov %v349
      %v351 = vlaneseq
      %v352 = vshrl.u32 %v351, 7
      %v353 = vmov %v352
      %s354 = smov [#allocation23]
      %v355 = vlaneseq
      %v356 = vand.u32 %v355, 127
      %vm357 = vcmp.ge.s32.totalorder %v356, 0
      %vm358 = vcmp.lt.s32.totalorder %v356, 4
      %vm359 = vmand %vm357, %vm358
      %v360 = vld [vmem:[%s354] sm:$0xf]
      %v361 = vsel %vm359, %v360, 0.0
      %v362 = vmul.f32 %v361, %v361
      %vm365 = vcmp.eq.s32.totalorder %v353, %v350
      %v366 = vsel %vm365, 0.0, %v362
      %v367 = vadd.f32 %v346, %v366
      %v368 = vadd.f32 %v347, %v362
      %369 = vadd.xlane.f32.xlu0 %v368
      %v370 = vpop.xlane.xlu0 %369
      %v371 = vrot.slane %v370, 4
      %v372 = vadd.f32 %v370, %v371
      %v373 = vrot.slane %v372, 2
      %v374 = vadd.f32 %v372, %v373
      %v375 = vrot.slane %v374, 1
      %v376 = vadd.f32 %v374, %v375
      %377 = vadd.xlane.f32.xlu0 %v367
      %v378 = vpop.xlane.xlu0 %377
      %v379 = vrot.slane %v378, 4
      %v380 = vadd.f32 %v378, %v379
      %v381 = vrot.slane %v380, 2
      %v382 = vadd.f32 %v380, %v381
      %v383 = vrot.slane %v382, 1
      %v384 = vadd.f32 %v382, %v383
      %s385 = vtos %v384
      %s386 = vtos %v376
      %s387 = smul.f32 1e-10, %s386
      %p388 = scmp.le.f32.partialorder %s385, %s387
      %p389 = scmp.ge.s32.totalorder %s294, 15
      %p390 = por %p388, %p389
    $region92: #{custom-call.2} parent=1 // loop_header_branch
      %878 = sbr.rel (%p390) target = $region96
    $region93: #{custom-call.2} parent=1 // loop_body
      loop: start=0, step=1, limit=7
      $region97: #{custom-call.2} parent=93 // loop_pre_header
        _
      $region98: #{custom-call.2} parent=93 // loop_header
        %s392 = sphi 0, %s396
        %p393 = scmp.ge.s32.totalorder %s392, 7
      $region99: #{custom-call.2} parent=93 // loop_header_branch
        %395 = sbr.rel (%p393) target = $region103
      $region100: #{custom-call.2} parent=93 // loop_body
        #allocation24 [shape = 'f32[1024]{0}', space=vmem, size = 0x1000, scoped, tag = 'a_tl_diag vmem']
        #allocation25 [shape = 'f32[1024]{0}', space=vmem, size = 0x1000, scoped, tag = 'a_tr_diag vmem']
        #allocation26 [shape = 'f32[1024]{0}', space=vmem, size = 0x1000, scoped, tag = 'a_br_diag vmem']
        #allocation27 [shape = 'f32[1024]{0}', space=vmem, size = 0x1000, scoped, tag = 'rt1 vmem']
        #allocation28 [shape = 'f32[1024]{0}', space=vmem, size = 0x1000, scoped, tag = 'rt2 vmem']
        #allocation29 [shape = 'f32[1024]{0}', space=vmem, size = 0x1000, scoped, tag = 'c vmem']
        #allocation30 [shape = 'f32[1024]{0}', space=vmem, size = 0x1000, scoped, tag = 's vmem']
        #allocation31 [shape = 'f32[4096]{0}', space=vmem, size = 0x4000, scoped, tag = 'c broadcast']
        #allocation32 [shape = 'f32[4096]{0}', space=vmem, size = 0x4000, scoped, tag = 's broadcast']
        %s397 = smov [#allocation20]
        %s398 = smov [#allocation24]
        %v399 = vlaneseq
        %v400 = vand.u32 %v399, 127
        %v401 = vmov %v400
        %v402 = vlaneseq
        %v403 = vshrl.u32 %v402, 7
        %v404 = vmov %v403
        %v405 = vld [vmem:[%s397] sm:$0xf]
        %vm408 = vcmp.eq.s32.totalorder %v404, %v401
        %v409 = vsel %vm408, %v405, 0.0
        %v410 = vrot.slane %v409, 4
        %v411 = vadd.f32 %v409, %v410
        %v412 = vrot.slane %v411, 2
        %v413 = vadd.f32 %v411, %v412
        %v414 = vrot.slane %v413, 1
        %v415 = vadd.f32 %v413, %v414
        %416 = vst [vmem:[%s398] sm:$0x1] %v415
        %s417 = smov [#allocation21]
        %s418 = smov [#allocation25]
        %v419 = vlaneseq
        %v420 = vand.u32 %v419, 127
        %v421 = vmov %v420
        %v422 = vlaneseq
        %v423 = vshrl.u32 %v422, 7
        %v424 = vmov %v423
        %v425 = vld [vmem:[%s417] sm:$0xf]
        %vm428 = vcmp.eq.s32.totalorder %v424, %v421
        %v429 = vsel %vm428, %v425, 0.0
        %v430 = vrot.slane %v429, 4
        %v431 = vadd.f32 %v429, %v430
        %v432 = vrot.slane %v431, 2
        %v433 = vadd.f32 %v431, %v432
        %v434 = vrot.slane %v433, 1
        %v435 = vadd.f32 %v433, %v434
        %436 = vst [vmem:[%s418] sm:$0x1] %v435
        %s437 = smov [#allocation23]
        %s438 = smov [#allocation26]
        %v439 = vlaneseq
        %v440 = vand.u32 %v439, 127
        %v441 = vmov %v440
        %v442 = vlaneseq
        %v443 = vshrl.u32 %v442, 7
        %v444 = vmov %v443
        %v445 = vld [vmem:[%s437] sm:$0xf]
        %vm448 = vcmp.eq.s32.totalorder %v444, %v441
        %v449 = vsel %vm448, %v445, 0.0
        %v450 = vrot.slane %v449, 4
        %v451 = vadd.f32 %v449, %v450
        %v452 = vrot.slane %v451, 2
        %v453 = vadd.f32 %v451, %v452
        %v454 = vrot.slane %v453, 1
        %v455 = vadd.f32 %v453, %v454
        %456 = vst [vmem:[%s438] sm:$0x1] %v455
        %s457 = smov [#allocation29]
        %s458 = smov [#allocation30]
        %s459 = smov [#allocation24]
        %v460 = vld [vmem:[%s459] sm:$0xff]
        %s461 = smov [#allocation25]
        %v462 = vld [vmem:[%s461] sm:$0xff]
        %s463 = smov [#allocation26]
        %v464 = vld [vmem:[%s463] sm:$0xff]
        %v465 = vsub.f32 %v464, %v460
        %v466 = vmul.f32 2.0, %v462
        %v467 = vrcp.pop %v466
        %v468 = vmul.f32 %v466, %v467
        %v469 = vsub.f32 1.0, %v468
        %v470 = vmul.f32 %v467, %v469
        %v471 = vadd.f32 %v467, %v470
        %vm472 = vweird.f32 %v466
        %vm473 = vweird.f32 %v467
        %vm474 = vmor %vm472, %vm473
        %v475 = vsel %vm474, %v467, %v471
        %v476 = vand.u32 2147483647, %v466
        %vm477 = vcmp.eq.f32.partialorder %v476, 8.507059e+37
        %v478 = vand.u32 %v466, 2147483648
        %v479 = vor.u32 1.1754944e-38, %v478
        %v480 = vsel %vm477, %v479, %v475
        %v481 = vmul.f32 %v465, %v480
        %vm482 = vcmp.ge.f32.partialorder %v481, 0.0
        %v483 = vmul.f32 %v481, %v481
        %v484 = vadd.f32 1.0, %v483
        %v485 = vrsqrt.pop %v484
        %v486 = vmul.f32 %v485, %v484
        %v487 = vmul.f32 %v486, %v485
        %v488 = vmul.f32 0.5, %v487
        %v489 = vsub.f32 1.5, %v488
        %v490 = vmul.f32 %v485, %v489
        %v491 = vmul.f32 %v484, %v490
        %vm492 = vcmp.eq.f32.partialorder %v484, inf
        %v493 = vsel %vm492, %v484, %v491
        %vm494 = vcmp.eq.f32.partialorder %v484, 0.0
        %v495 = vand.u32 %v484, 2147483648
        %v496 = vsel %vm494, %v495, %v493
        %v497 = vxor.u32 %v496, 2147483648
        %v498 = vsel %vm482, %v496, %v497
        %v499 = vadd.f32 %v481, %v498
        %v500 = vrcp.pop %v499
        %v501 = vmul.f32 %v499, %v500
        %v502 = vsub.f32 1.0, %v501
        %v503 = vmul.f32 %v500, %v502
        %v504 = vadd.f32 %v500, %v503
        %vm505 = vweird.f32 %v499
        %vm506 = vweird.f32 %v500
        %vm507 = vmor %vm505, %vm506
        %v508 = vsel %vm507, %v500, %v504
        %v509 = vand.u32 2147483647, %v499
        %vm510 = vcmp.eq.f32.partialorder %v509, 8.507059e+37
        %v511 = vand.u32 %v499, 2147483648
        %v512 = vor.u32 1.1754944e-38, %v511
        %v513 = vsel %vm510, %v512, %v508
        %v514 = vand.u32 2147483647, %v460
        %v515 = vand.u32 2147483647, %v462
        %v516 = vand.u32 2147483647, %v464
        %v517 = vmin.f32 %v514, %v516
        %v518 = vmul.f32 1.1920929e-08, %v517
        %vm519 = vcmp.le.f32.partialorder %v515, %v518
        %v520 = vsel %vm519, 0.0, %v513
        %v521 = vmul.f32 %v520, %v520
        %v522 = vadd.f32 1.0, %v521
        %v523 = vrsqrt.pop %v522
        %v524 = vmul.f32 %v523, %v522
        %v525 = vmul.f32 %v524, %v523
        %v526 = vmul.f32 0.5, %v525
        %v527 = vsub.f32 1.5, %v526
        %v528 = vmul.f32 %v523, %v527
        %vm529 = vweird.f32 %v522
        %vm530 = vweird.f32 %v523
        %vm531 = vmor %vm529, %vm530
        %v532 = vsel %vm531, %v523, %v528
        %v533 = vmul.f32 %v520, %v532
        %v534 = vmul.f32 %v520, %v462
        %v535 = vsub.f32 %v460, %v534
        %v536 = vmul.f32 %v520, %v462
        %v537 = vadd.f32 %v464, %v536
        %s538 = smov [#allocation27]
        %539 = vst [vmem:[%s538] sm:$0xff] %v535
        %s540 = smov [#allocation28]
        %541 = vst [vmem:[%s540] sm:$0xff] %v537
        %s542 = smov %s457
        %543 = vst [vmem:[%s542] sm:$0xff] %v532
        %s544 = smov %s458
        %545 = vst [vmem:[%s544] sm:$0xff] %v533
        %s546 = smov [#allocation29]
        %v547 = vld [vmem:[%s546] ss:$0 sm:$0xff]
        %v548 = vlaneseq
        %v549 = vand.u32 %v548, 127
        %v550 = vmov %v549
        %v551 = vlaneseq
        %v552 = vshrl.u32 %v551, 7
        %v553 = vmov %v552
        %vm555 = vcmp.eq.s32.totalorder %v553, %v550
        %v556 = vsel %vm555, %v547, 0.0
        %557 = vadd.xlane.f32.xlu0 %v556
        %v558 = vpop.xlane.xlu0 %557
        %s559 = smov [#allocation31]
        %560 = vst [vmem:[%s559] sm:$0xff] %v558
        %s561 = smov [#allocation30]
        %v562 = vld [vmem:[%s561] ss:$0 sm:$0xff]
        %v563 = vlaneseq
        %v564 = vand.u32 %v563, 127
        %v565 = vmov %v564
        %v566 = vlaneseq
        %v567 = vshrl.u32 %v566, 7
        %v568 = vmov %v567
        %vm570 = vcmp.eq.s32.totalorder %v568, %v565
        %v571 = vsel %vm570, %v562, 0.0
        %572 = vadd.xlane.f32.xlu0 %v571
        %v573 = vpop.xlane.xlu0 %572
        %s574 = smov [#allocation32]
        %575 = vst [vmem:[%s574] sm:$0xff] %v573
        %s576 = smov [#allocation31]
        %v577 = vld [vmem:[%s576] sm:$0xff]
        %s578 = smov [#allocation32]
        %v579 = vld [vmem:[%s578] sm:$0xff]
        %s580 = smov [#allocation20]
        %s581 = smov [#allocation21]
        %s582 = smov [#allocation22]
        %s583 = smov [#allocation23]
        %v584 = vld [vmem:[%s580] sm:$0xf]
        %v585 = vld [vmem:[%s581] sm:$0xf]
        %v586 = vld [vmem:[%s582] sm:$0xf]
        %v587 = vld [vmem:[%s583] sm:$0xf]
        %v588 = vmul.f32 %v577, %v584
        %v589 = vmul.f32 %v579, %v586
        %v590 = vsub.f32 %v588, %v589
        %v591 = vmul.f32 %v577, %v585
        %v592 = vmul.f32 %v579, %v587
        %v593 = vsub.f32 %v591, %v592
        %v594 = vmul.f32 %v579, %v584
        %v595 = vmul.f32 %v577, %v586
        %v596 = vadd.f32 %v594, %v595
        %v597 = vmul.f32 %v579, %v585
        %v598 = vmul.f32 %v577, %v587
        %v599 = vadd.f32 %v597, %v598
        %600 = vst [vmem:[%s580] sm:$0xf] %v590
        %601 = vst [vmem:[%s581] sm:$0xf] %v593
        %602 = vst [vmem:[%s582] sm:$0xf] %v596
        %603 = vst [vmem:[%s583] sm:$0xf] %v599
        %s604 = smov [#allocation29]
        %v605 = vld [vmem:[%s604] ss:$0 sm:$0xff]
        %s606 = smov [#allocation30]
        %v607 = vld [vmem:[%s606] ss:$0 sm:$0xff]
        %s608 = smov [#allocation20]
        %s609 = smov [#allocation21]
        %s610 = smov [#allocation22]
        %s611 = smov [#allocation23]
        %v612 = vld [vmem:[%s608] sm:$0xf]
        %v613 = vld [vmem:[%s609] sm:$0xf]
        %v614 = vld [vmem:[%s610] sm:$0xf]
        %v615 = vld [vmem:[%s611] sm:$0xf]
        %v616 = vmul.f32 %v605, %v612
        %v617 = vmul.f32 %v607, %v613
        %v618 = vsub.f32 %v616, %v617
        %v619 = vmul.f32 %v607, %v612
        %v620 = vmul.f32 %v605, %v613
        %v621 = vadd.f32 %v619, %v620
        %v622 = vmul.f32 %v605, %v614
        %v623 = vmul.f32 %v607, %v615
        %v624 = vsub.f32 %v622, %v623
        %v625 = vmul.f32 %v607, %v614
        %v626 = vmul.f32 %v605, %v615
        %v627 = vadd.f32 %v625, %v626
        %628 = vst [vmem:[%s608] sm:$0xf] %v618
        %629 = vst [vmem:[%s609] sm:$0xf] %v621
        %630 = vst [vmem:[%s610] sm:$0xf] %v624
        %631 = vst [vmem:[%s611] sm:$0xf] %v627
        %s632 = smov [#allocation20]
        %s633 = smov [#allocation27]
        %v634 = vlaneseq
        %v635 = vand.u32 %v634, 127
        %v636 = vmov %v635
        %v637 = vlaneseq
        %v638 = vshrl.u32 %v637, 7
        %v639 = vmov %v638
        %v640 = vld [vmem:[%s633] ss:$0 sm:$0xff]
        %v641 = vld [vmem:[%s632] sm:$0xf]
        %vm644 = vcmp.eq.s32.totalorder %v639, %v636
        %v645 = vsel %vm644, %v640, %v641
        %646 = vst [vmem:[%s632] sm:$0xf] %v645
        %s647 = smov [#allocation21]
        %v648 = vlaneseq
        %v649 = vand.u32 %v648, 127
        %v650 = vmov %v649
        %v651 = vlaneseq
        %v652 = vshrl.u32 %v651, 7
        %v653 = vmov %v652
        %v654 = vld [vmem:[%s647] sm:$0xf]
        %vm657 = vcmp.eq.s32.totalorder %v653, %v650
        %v658 = vsel %vm657, 0.0, %v654
        %659 = vst [vmem:[%s647] sm:$0xf] %v658
        %s660 = smov [#allocation22]
        %v661 = vlaneseq
        %v662 = vand.u32 %v661, 127
        %v663 = vmov %v662
        %v664 = vlaneseq
        %v665 = vshrl.u32 %v664, 7
        %v666 = vmov %v665
        %v667 = vld [vmem:[%s660] sm:$0xf]
        %vm670 = vcmp.eq.s32.totalorder %v666, %v663
        %v671 = vsel %vm670, 0.0, %v667
        %672 = vst [vmem:[%s660] sm:$0xf] %v671
        %s673 = smov [#allocation23]
        %s674 = smov [#allocation28]
        %v675 = vlaneseq
        %v676 = vand.u32 %v675, 127
        %v677 = vmov %v676
        %v678 = vlaneseq
        %v679 = vshrl.u32 %v678, 7
        %v680 = vmov %v679
        %v681 = vld [vmem:[%s674] ss:$0 sm:$0xff]
        %v682 = vld [vmem:[%s673] sm:$0xf]
        %vm685 = vcmp.eq.s32.totalorder %v680, %v677
        %v686 = vsel %vm685, %v681, %v682
        %687 = vst [vmem:[%s673] sm:$0xf] %v686
        %s688 = smov [#allocation20]
        %s689 = smov [#allocation21]
        %v690 = vld [vmem:[%s689] sm:$0xf]
        %691 = vrot.lane.b32.xlu0 %v690, 1
        %v692 = vpop.permute.xlu0 %691
        %v693 = vld [vmem:[%s688] sm:$0xf]
        %v694 = vld [vmem:[%s688] sm:$0xf]
        %695 = vrot.lane.b32.xlu0 %v694, 1
        %v696 = vpop.permute.xlu0 %695
        %v697 = vlaneseq
        %v698 = vand.u32 %v697, 127
        %vm699 = vcmp.eq.s32.totalorder %v698, 0
        %v700 = vsel %vm699, %v694, %v696
        %v701 = vlaneseq
        %v702 = vand.u32 %v701, 127
        %vm703 = vcmp.eq.s32.totalorder %v702, 1
        %v704 = vsel %vm703, %v692, %v700
        %v705 = vlaneseq
        %v706 = vand.u32 %v705, 127
        %vm707 = vcmp.ge.s32.totalorder %v706, 0
        %vm708 = vcmp.lt.s32.totalorder %v706, 4
        %vm709 = vmand %vm707, %vm708
        %v710 = vsel %vm709, %v704, 0.0
        %v711 = vld [vmem:[%s689] sm:$0xf]
        %712 = vrot.lane.b32.xlu0 %v711, 127
        %v713 = vpop.permute.xlu0 %712
        %v714 = vlaneseq
        %v715 = vand.u32 %v714, 127
        %vm716 = vcmp.eq.s32.totalorder %v715, 3
        %v717 = vsel %vm716, %v693, %v713
        %718 = vst [vmem:[%s688] sm:$0xf] %v710
        %719 = vst [vmem:[%s689] sm:$0xf] %v717
        %s720 = smov [#allocation22]
        %s721 = smov [#allocation23]
        %v722 = vld [vmem:[%s721] sm:$0xf]
        %723 = vrot.lane.b32.xlu0 %v722, 1
        %v724 = vpop.permute.xlu0 %723
        %v725 = vld [vmem:[%s720] sm:$0xf]
        %v726 = vld [vmem:[%s720] sm:$0xf]
        %727 = vrot.lane.b32.xlu0 %v726, 1
        %v728 = vpop.permute.xlu0 %727
        %v729 = vlaneseq
        %v730 = vand.u32 %v729, 127
        %vm731 = vcmp.eq.s32.totalorder %v730, 0
        %v732 = vsel %vm731, %v726, %v728
        %v733 = vlaneseq
        %v734 = vand.u32 %v733, 127
        %vm735 = vcmp.eq.s32.totalorder %v734, 1
        %v736 = vsel %vm735, %v724, %v732
        %v737 = vlaneseq
        %v738 = vand.u32 %v737, 127
        %vm739 = vcmp.ge.s32.totalorder %v738, 0
        %vm740 = vcmp.lt.s32.totalorder %v738, 4
        %vm741 = vmand %vm739, %vm740
        %v742 = vsel %vm741, %v736, 0.0
        %v743 = vld [vmem:[%s721] sm:$0xf]
        %744 = vrot.lane.b32.xlu0 %v743, 127
        %v745 = vpop.permute.xlu0 %744
        %v746 = vlaneseq
        %v747 = vand.u32 %v746, 127
        %vm748 = vcmp.eq.s32.totalorder %v747, 3
        %v749 = vsel %vm748, %v725, %v745
        %750 = vst [vmem:[%s720] sm:$0xf] %v742
        %751 = vst [vmem:[%s721] sm:$0xf] %v749
        %s752 = smov [#allocation20]
        %s753 = smov [#allocation22]
        %v754 = vld [vmem:[%s752] ss:$0 sm:$0xff]
        %s756 = scalar_lea.vmem %s752, 4294967295
        %v757 = vld [vmem:[%s756] sm:$0xe]
        %v758 = vlaneseq
        %v759 = vshrl.u32 %v758, 7
        %vm760 = vcmp.eq.s32.totalorder %v759, 0
        %v761 = vsel %vm760, %v754, %v757
        %s762 = scalar_lea.vmem %s752, 3
        %v763 = vld [vmem:[%s762] ss:$0 sm:$0xff]
        %764 = vst [vmem:[%s752] sm:$0xf] %v761
        %v765 = vld [vmem:[%s753] ss:$0 sm:$0xff]
        %s766 = scalar_lea.vmem %s752, 1
        %767 = vst [vmem:[%s766] sm:$0x1] %v765
        %s768 = scalar_lea.vmem %s753, 1
        %v769 = vld [vmem:[%s768] sm:$0x7]
        %v770 = vlaneseq
        %v771 = vshrl.u32 %v770, 7
        %vm772 = vcmp.eq.s32.totalorder %v771, 3
        %v773 = vsel %vm772, %v763, %v769
        %v774 = vld [vmem:[%s753] ss:$0 sm:$0xff]
        %775 = vst [vmem:[%s753] sm:$0xf] %v773
        %s776 = smov [#allocation21]
        %s777 = smov [#allocation23]
        %v778 = vld [vmem:[%s776] ss:$0 sm:$0xff]
        %s780 = scalar_lea.vmem %s776, 4294967295
        %v781 = vld [vmem:[%s780] sm:$0xe]
        %v782 = vlaneseq
        %v783 = vshrl.u32 %v782, 7
        %vm784 = vcmp.eq.s32.totalorder %v783, 0
        %v785 = vsel %vm784, %v778, %v781
        %s786 = scalar_lea.vmem %s776, 3
        %v787 = vld [vmem:[%s786] ss:$0 sm:$0xff]
        %788 = vst [vmem:[%s776] sm:$0xf] %v785
        %v789 = vld [vmem:[%s777] ss:$0 sm:$0xff]
        %s790 = scalar_lea.vmem %s776, 1
        %791 = vst [vmem:[%s790] sm:$0x1] %v789
        %s792 = scalar_lea.vmem %s777, 1
        %v793 = vld [vmem:[%s792] sm:$0x7]
        %v794 = vlaneseq
        %v795 = vshrl.u32 %v794, 7
        %vm796 = vcmp.eq.s32.totalorder %v795, 3
        %v797 = vsel %vm796, %v787, %v793
        %v798 = vld [vmem:[%s777] ss:$0 sm:$0xff]
        %799 = vst [vmem:[%s777] sm:$0xf] %v797
        %s800 = smov [#allocation31]
        %v801 = vld [vmem:[%s800] sm:$0xff]
        %s802 = smov [#allocation32]
        %v803 = vld [vmem:[%s802] sm:$0xff]
        %s804 = smov [#allocation12]
        %s805 = smov [#allocation14]
        %s806 = smov [#allocation16]
        %s807 = smov [#allocation18]
        %v808 = vld [vmem:[%s804] sm:$0xf]
        %v809 = vld [vmem:[%s805] sm:$0xf]
        %v810 = vld [vmem:[%s806] sm:$0xf]
        %v811 = vld [vmem:[%s807] sm:$0xf]
        %v812 = vmul.f32 %v801, %v808
        %v813 = vmul.f32 %v803, %v810
        %v814 = vsub.f32 %v812, %v813
        %v815 = vmul.f32 %v801, %v809
        %v816 = vmul.f32 %v803, %v811
        %v817 = vsub.f32 %v815, %v816
        %v818 = vmul.f32 %v803, %v808
        %v819 = vmul.f32 %v801, %v810
        %v820 = vadd.f32 %v818, %v819
        %v821 = vmul.f32 %v803, %v809
        %v822 = vmul.f32 %v801, %v811
        %v823 = vadd.f32 %v821, %v822
        %824 = vst [vmem:[%s804] sm:$0xf] %v814
        %825 = vst [vmem:[%s805] sm:$0xf] %v817
        %826 = vst [vmem:[%s806] sm:$0xf] %v820
        %827 = vst [vmem:[%s807] sm:$0xf] %v823
        %s828 = smov [#allocation12]
        %s829 = smov [#allocation16]
        %v830 = vld [vmem:[%s828] ss:$0 sm:$0xff]
        %s832 = scalar_lea.vmem %s828, 4294967295
        %v833 = vld [vmem:[%s832] sm:$0xe]
        %v834 = vlaneseq
        %v835 = vshrl.u32 %v834, 7
        %vm836 = vcmp.eq.s32.totalorder %v835, 0
        %v837 = vsel %vm836, %v830, %v833
        %s838 = scalar_lea.vmem %s828, 3
        %v839 = vld [vmem:[%s838] ss:$0 sm:$0xff]
        %840 = vst [vmem:[%s828] sm:$0xf] %v837
        %v841 = vld [vmem:[%s829] ss:$0 sm:$0xff]
        %s842 = scalar_lea.vmem %s828, 1
        %843 = vst [vmem:[%s842] sm:$0x1] %v841
        %s844 = scalar_lea.vmem %s829, 1
        %v845 = vld [vmem:[%s844] sm:$0x7]
        %v846 = vlaneseq
        %v847 = vshrl.u32 %v846, 7
        %vm848 = vcmp.eq.s32.totalorder %v847, 3
        %v849 = vsel %vm848, %v839, %v845
        %v850 = vld [vmem:[%s829] ss:$0 sm:$0xff]
        %851 = vst [vmem:[%s829] sm:$0xf] %v849
        %s852 = smov [#allocation14]
        %s853 = smov [#allocation18]
        %v854 = vld [vmem:[%s852] ss:$0 sm:$0xff]
        %s856 = scalar_lea.vmem %s852, 4294967295
        %v857 = vld [vmem:[%s856] sm:$0xe]
        %v858 = vlaneseq
        %v859 = vshrl.u32 %v858, 7
        %vm860 = vcmp.eq.s32.totalorder %v859, 0
        %v861 = vsel %vm860, %v854, %v857
        %s862 = scalar_lea.vmem %s852, 3
        %v863 = vld [vmem:[%s862] ss:$0 sm:$0xff]
        %864 = vst [vmem:[%s852] sm:$0xf] %v861
        %v865 = vld [vmem:[%s853] ss:$0 sm:$0xff]
        %s866 = scalar_lea.vmem %s852, 1
        %867 = vst [vmem:[%s866] sm:$0x1] %v865
        %s868 = scalar_lea.vmem %s853, 1
        %v869 = vld [vmem:[%s868] sm:$0x7]
        %v870 = vlaneseq
        %v871 = vshrl.u32 %v870, 7
        %vm872 = vcmp.eq.s32.totalorder %v871, 3
        %v873 = vsel %vm872, %v863, %v869
        %v874 = vld [vmem:[%s853] ss:$0 sm:$0xff]
        %875 = vst [vmem:[%s853] sm:$0xf] %v873
      $region101: #{custom-call.2} parent=93 // loop_footer
        %s396 = sadd.s32 1, %s392
      $region102: #{custom-call.2} parent=93 // loop_footer_branch
        %391 = sbr.rel target = $region98
      $region103: #{custom-call.2} parent=93 // loop_exit
        _
      %s876 = sadd.s32 %s294, 1
    $region94: #{custom-call.2} parent=1 // loop_footer
      _
    $region95: #{custom-call.2} parent=1 // loop_footer_branch
      %293 = sbr.rel target = $region91
    $region96: #{custom-call.2} parent=1 // loop_exit
      _
    %s879 = smov [#allocation20]
    %s880 = smov [#allocation8]
    %v881 = vlaneseq
    %v882 = vand.u32 %v881, 127
    %v883 = vmov %v882
    %v884 = vlaneseq
    %v885 = vshrl.u32 %v884, 7
    %v886 = vmov %v885
    %v887 = vld [vmem:[%s879] sm:$0xf]
    %vm890 = vcmp.eq.s32.totalorder %v886, %v883
    %v891 = vsel %vm890, %v887, 0.0
    %v892 = vrot.slane %v891, 4
    %v893 = vadd.f32 %v891, %v892
    %v894 = vrot.slane %v893, 2
    %v895 = vadd.f32 %v893, %v894
    %v896 = vrot.slane %v895, 1
    %v897 = vadd.f32 %v895, %v896
    %898 = vst [vmem:[%s880] sm:$0x1] %v897
    %s899 = smov [#allocation23]
    %s900 = smov [#allocation10]
    %v901 = vlaneseq
    %v902 = vand.u32 %v901, 127
    %v903 = vmov %v902
    %v904 = vlaneseq
    %v905 = vshrl.u32 %v904, 7
    %v906 = vmov %v905
    %v907 = vld [vmem:[%s899] sm:$0xf]
    %vm910 = vcmp.eq.s32.totalorder %v906, %v903
    %v911 = vsel %vm910, %v907, 0.0
    %v912 = vrot.slane %v911, 4
    %v913 = vadd.f32 %v911, %v912
    %v914 = vrot.slane %v913, 2
    %v915 = vadd.f32 %v913, %v914
    %v916 = vrot.slane %v915, 1
    %v917 = vadd.f32 %v915, %v916
    %918 = vst [vmem:[%s900] sm:$0x1] %v917
    %s920 = ssub.s32 2, 1
    %v921 = vld [vmem:[#allocation8] sm:%s920]
    %s923 = ssub.s32 2, 1
    %924 = vst [vmem:[#allocation9] sm:%s923] %v921
    %s926 = ssub.s32 2, 1
    %v927 = vld [vmem:[#allocation10] sm:%s926]
    %s929 = ssub.s32 2, 1
    %930 = vst [vmem:[#allocation11] sm:%s929] %v927
    %s932 = ssub.s32 16, 1
    %v933 = vld [vmem:[#allocation12] sm:%s932]
    %s935 = ssub.s32 16, 1
    %936 = vst [vmem:[#allocation13] sm:%s935] %v933
    %s938 = ssub.s32 16, 1
    %v939 = vld [vmem:[#allocation14] sm:%s938]
    %s941 = ssub.s32 16, 1
    %942 = vst [vmem:[#allocation15] sm:%s941] %v939
    %s944 = ssub.s32 16, 1
    %v945 = vld [vmem:[#allocation16] sm:%s944]
    %s947 = ssub.s32 16, 1
    %948 = vst [vmem:[#allocation17] sm:%s947] %v945
    %s950 = ssub.s32 16, 1
    %v951 = vld [vmem:[#allocation18] sm:%s950]
    %s953 = ssub.s32 16, 1
    %954 = vst [vmem:[#allocation19] sm:%s953] %v951
    // Predicated region
    $region104: #{custom-call.2} parent=1 // pred_check
      _
    $region105: #{custom-call.2} parent=1 // pred_check_branch
      %956 = sbr.rel (0) target = $region107
    $region106: #{custom-call.2} parent=1 // pred_region
      // Predicated region
      $region108: #{custom-call.2} parent=106 // pred_check
        _
      $region109: #{custom-call.2} parent=106 // pred_check_branch
        %958 = sbr.rel (0) target = $region111
      $region110: #{custom-call.2} parent=106 // pred_region
        %p960 = scmp.gt.s32.totalorder 0, 0
        // Predicated region
        $region112: #{custom-call.2} parent=110 // pred_check
          %p961 = pneg %p960
        $region113: #{custom-call.2} parent=110 // pred_check_branch
          %963 = sbr.rel (%p961) target = $region115
        $region114: #{custom-call.2} parent=110 // pred_region
          %s964 = ssub.s32 0, 1
          %s965 = smul.u32 %s964, 8
          %s966 = scalar_lea.vmem [#allocation9], %s965
          %v967 = vld [vmem:[#allocation9] sm:$0xff]
          // While loop
          $region116: #{custom-call.2} parent=114 // loop_pre_header
            _
          $region117: #{custom-call.2} parent=114 // loop_header
            %s968 = sphi [#allocation9], %s990
            %s969 = sphi %s4, %s991
            %v970 = vphi %v967, %v992
            %s971 = ssub.s32 %s966, 64
            %p972 = scmp.gt.s32.totalorder %s968, %s971
          $region118: #{custom-call.2} parent=114 // loop_header_branch
            %974 = sbr.rel (%p972) target = $region122
          $region119: #{custom-call.2} parent=114 // loop_body
            %975 = vst [vmem:[%s969] sm:$0xff] %v970
            %v976 = vld [vmem:[%s968 + $0x8] sm:$0xff]
            %977 = vst [vmem:[%s969 + $0x8] sm:$0xff] %v976
            %v978 = vld [vmem:[%s968 + $0x10] sm:$0xff]
            %979 = vst [vmem:[%s969 + $0x10] sm:$0xff] %v978
            %v980 = vld [vmem:[%s968 + $0x18] sm:$0xff]
            %981 = vst [vmem:[%s969 + $0x18] sm:$0xff] %v980
            %v982 = vld [vmem:[%s968 + $0x20] sm:$0xff]
            %983 = vst [vmem:[%s969 + $0x20] sm:$0xff] %v982
            %v984 = vld [vmem:[%s968 + $0x28] sm:$0xff]
            %985 = vst [vmem:[%s969 + $0x28] sm:$0xff] %v984
            %v986 = vld [vmem:[%s968 + $0x30] sm:$0xff]
            %987 = vst [vmem:[%s969 + $0x30] sm:$0xff] %v986
            %v988 = vld [vmem:[%s968 + $0x38] sm:$0xff]
            %989 = vst [vmem:[%s969 + $0x38] sm:$0xff] %v988
          $region120: #{custom-call.2} parent=114 // loop_footer
            %s990 = scalar_lea.vmem %s968, 64
            %s991 = scalar_lea.vmem %s969, 64
            %v992 = vld [vmem:[%s968 + $0x40] sm:$0xff]
          $region121: #{custom-call.2} parent=114 // loop_footer_branch
            %993 = sbr.rel target = $region117
          $region122: #{custom-call.2} parent=114 // loop_exit
            _
          // While loop
          $region123: #{custom-call.2} parent=114 // loop_pre_header
            _
          $region124: #{custom-call.2} parent=114 // loop_header
            %s994 = sphi %s968, %s1002
            %s995 = sphi %s969, %s1003
            %v996 = vphi %v970, %v996
            %p997 = scmp.gt.s32.totalorder %s994, %s966
          $region125: #{custom-call.2} parent=114 // loop_header_branch
            %999 = sbr.rel (%p997) target = $region129
          $region126: #{custom-call.2} parent=114 // loop_body
            %v1000 = vld [vmem:[%s994] sm:$0xff]
            %1001 = vst [vmem:[%s995] sm:$0xff] %v1000
          $region127: #{custom-call.2} parent=114 // loop_footer
            %s1002 = scalar_lea.vmem %s994, 8
            %s1003 = scalar_lea.vmem %s995, 8
          $region128: #{custom-call.2} parent=114 // loop_footer_branch
            %1004 = sbr.rel target = $region124
          $region129: #{custom-call.2} parent=114 // loop_exit
            _
        $region115: #{custom-call.2} parent=110 // pred_fallthru
          _
        %s1006 = ssub.s32 2, 1
        %s1007 = smul.u32 0, 8
        %s1008 = scalar_lea.vmem %s4, %s1007
        %s1009 = smul.u32 0, 8
        %s1010 = scalar_lea.vmem [#allocation9], %s1009
        %v1011 = vld [vmem:[%s1010] sm:%s1006]
        %1012 = vst [vmem:[%s1008] sm:%s1006] %v1011
      $region111: #{custom-call.2} parent=106 // pred_fallthru
        _
    $region107: #{custom-call.2} parent=1 // pred_fallthru
      _
    // Predicated region
    $region130: #{custom-call.2} parent=1 // pred_check
      _
    $region131: #{custom-call.2} parent=1 // pred_check_branch
      %1014 = sbr.rel (0) target = $region133
    $region132: #{custom-call.2} parent=1 // pred_region
      // Predicated region
      $region134: #{custom-call.2} parent=132 // pred_check
        _
      $region135: #{custom-call.2} parent=132 // pred_check_branch
        %1016 = sbr.rel (0) target = $region137
      $region136: #{custom-call.2} parent=132 // pred_region
        %p1018 = scmp.gt.s32.totalorder 0, 0
        // Predicated region
        $region138: #{custom-call.2} parent=136 // pred_check
          %p1019 = pneg %p1018
        $region139: #{custom-call.2} parent=136 // pred_check_branch
          %1021 = sbr.rel (%p1019) target = $region141
        $region140: #{custom-call.2} parent=136 // pred_region
          %s1022 = ssub.s32 0, 1
          %s1023 = smul.u32 %s1022, 8
          %s1024 = scalar_lea.vmem [#allocation11], %s1023
          %v1025 = vld [vmem:[#allocation11] sm:$0xff]
          // While loop
          $region142: #{custom-call.2} parent=140 // loop_pre_header
            _
          $region143: #{custom-call.2} parent=140 // loop_header
            %s1026 = sphi [#allocation11], %s1048
            %s1027 = sphi %s5, %s1049
            %v1028 = vphi %v1025, %v1050
            %s1029 = ssub.s32 %s1024, 64
            %p1030 = scmp.gt.s32.totalorder %s1026, %s1029
          $region144: #{custom-call.2} parent=140 // loop_header_branch
            %1032 = sbr.rel (%p1030) target = $region148
          $region145: #{custom-call.2} parent=140 // loop_body
            %1033 = vst [vmem:[%s1027] sm:$0xff] %v1028
            %v1034 = vld [vmem:[%s1026 + $0x8] sm:$0xff]
            %1035 = vst [vmem:[%s1027 + $0x8] sm:$0xff] %v1034
            %v1036 = vld [vmem:[%s1026 + $0x10] sm:$0xff]
            %1037 = vst [vmem:[%s1027 + $0x10] sm:$0xff] %v1036
            %v1038 = vld [vmem:[%s1026 + $0x18] sm:$0xff]
            %1039 = vst [vmem:[%s1027 + $0x18] sm:$0xff] %v1038
            %v1040 = vld [vmem:[%s1026 + $0x20] sm:$0xff]
            %1041 = vst [vmem:[%s1027 + $0x20] sm:$0xff] %v1040
            %v1042 = vld [vmem:[%s1026 + $0x28] sm:$0xff]
            %1043 = vst [vmem:[%s1027 + $0x28] sm:$0xff] %v1042
            %v1044 = vld [vmem:[%s1026 + $0x30] sm:$0xff]
            %1045 = vst [vmem:[%s1027 + $0x30] sm:$0xff] %v1044
            %v1046 = vld [vmem:[%s1026 + $0x38] sm:$0xff]
            %1047 = vst [vmem:[%s1027 + $0x38] sm:$0xff] %v1046
          $region146: #{custom-call.2} parent=140 // loop_footer
            %s1048 = scalar_lea.vmem %s1026, 64
            %s1049 = scalar_lea.vmem %s1027, 64
            %v1050 = vld [vmem:[%s1026 + $0x40] sm:$0xff]
          $region147: #{custom-call.2} parent=140 // loop_footer_branch
            %1051 = sbr.rel target = $region143
          $region148: #{custom-call.2} parent=140 // loop_exit
            _
          // While loop
          $region149: #{custom-call.2} parent=140 // loop_pre_header
            _
          $region150: #{custom-call.2} parent=140 // loop_header
            %s1052 = sphi %s1026, %s1060
            %s1053 = sphi %s1027, %s1061
            %v1054 = vphi %v1028, %v1054
            %p1055 = scmp.gt.s32.totalorder %s1052, %s1024
          $region151: #{custom-call.2} parent=140 // loop_header_branch
            %1057 = sbr.rel (%p1055) target = $region155
          $region152: #{custom-call.2} parent=140 // loop_body
            %v1058 = vld [vmem:[%s1052] sm:$0xff]
            %1059 = vst [vmem:[%s1053] sm:$0xff] %v1058
          $region153: #{custom-call.2} parent=140 // loop_footer
            %s1060 = scalar_lea.vmem %s1052, 8
            %s1061 = scalar_lea.vmem %s1053, 8
          $region154: #{custom-call.2} parent=140 // loop_footer_branch
            %1062 = sbr.rel target = $region150
          $region155: #{custom-call.2} parent=140 // loop_exit
            _
        $region141: #{custom-call.2} parent=136 // pred_fallthru
          _
        %s1064 = ssub.s32 2, 1
        %s1065 = smul.u32 0, 8
        %s1066 = scalar_lea.vmem %s5, %s1065
        %s1067 = smul.u32 0, 8
        %s1068 = scalar_lea.vmem [#allocation11], %s1067
        %v1069 = vld [vmem:[%s1068] sm:%s1064]
        %1070 = vst [vmem:[%s1066] sm:%s1064] %v1069
      $region137: #{custom-call.2} parent=132 // pred_fallthru
        _
    $region133: #{custom-call.2} parent=1 // pred_fallthru
      _
    // Predicated region
    $region156: #{custom-call.2} parent=1 // pred_check
      _
    $region157: #{custom-call.2} parent=1 // pred_check_branch
      %1072 = sbr.rel (0) target = $region159
    $region158: #{custom-call.2} parent=1 // pred_region
      %p1074 = scmp.gt.s32.totalorder 0, 0
      // Predicated region
      $region160: #{custom-call.2} parent=158 // pred_check
        %p1075 = pneg %p1074
      $region161: #{custom-call.2} parent=158 // pred_check_branch
        %1077 = sbr.rel (%p1075) target = $region163
      $region162: #{custom-call.2} parent=158 // pred_region
        %s1078 = ssub.s32 0, 1
        %s1079 = smul.u32 %s1078, 8
        %s1080 = scalar_lea.vmem [#allocation13], %s1079
        %v1081 = vld [vmem:[#allocation13] sm:$0xff]
        // While loop
        $region164: #{custom-call.2} parent=162 // loop_pre_header
          _
        $region165: #{custom-call.2} parent=162 // loop_header
          %s1082 = sphi [#allocation13], %s1104
          %s1083 = sphi %s6, %s1105
          %v1084 = vphi %v1081, %v1106
          %s1085 = ssub.s32 %s1080, 64
          %p1086 = scmp.gt.s32.totalorder %s1082, %s1085
        $region166: #{custom-call.2} parent=162 // loop_header_branch
          %1088 = sbr.rel (%p1086) target = $region170
        $region167: #{custom-call.2} parent=162 // loop_body
          %1089 = vst [vmem:[%s1083] sm:$0xff] %v1084
          %v1090 = vld [vmem:[%s1082 + $0x8] sm:$0xff]
          %1091 = vst [vmem:[%s1083 + $0x8] sm:$0xff] %v1090
          %v1092 = vld [vmem:[%s1082 + $0x10] sm:$0xff]
          %1093 = vst [vmem:[%s1083 + $0x10] sm:$0xff] %v1092
          %v1094 = vld [vmem:[%s1082 + $0x18] sm:$0xff]
          %1095 = vst [vmem:[%s1083 + $0x18] sm:$0xff] %v1094
          %v1096 = vld [vmem:[%s1082 + $0x20] sm:$0xff]
          %1097 = vst [vmem:[%s1083 + $0x20] sm:$0xff] %v1096
          %v1098 = vld [vmem:[%s1082 + $0x28] sm:$0xff]
          %1099 = vst [vmem:[%s1083 + $0x28] sm:$0xff] %v1098
          %v1100 = vld [vmem:[%s1082 + $0x30] sm:$0xff]
          %1101 = vst [vmem:[%s1083 + $0x30] sm:$0xff] %v1100
          %v1102 = vld [vmem:[%s1082 + $0x38] sm:$0xff]
          %1103 = vst [vmem:[%s1083 + $0x38] sm:$0xff] %v1102
        $region168: #{custom-call.2} parent=162 // loop_footer
          %s1104 = scalar_lea.vmem %s1082, 64
          %s1105 = scalar_lea.vmem %s1083, 64
          %v1106 = vld [vmem:[%s1082 + $0x40] sm:$0xff]
        $region169: #{custom-call.2} parent=162 // loop_footer_branch
          %1107 = sbr.rel target = $region165
        $region170: #{custom-call.2} parent=162 // loop_exit
          _
        // While loop
        $region171: #{custom-call.2} parent=162 // loop_pre_header
          _
        $region172: #{custom-call.2} parent=162 // loop_header
          %s1108 = sphi %s1082, %s1116
          %s1109 = sphi %s1083, %s1117
          %v1110 = vphi %v1084, %v1110
          %p1111 = scmp.gt.s32.totalorder %s1108, %s1080
        $region173: #{custom-call.2} parent=162 // loop_header_branch
          %1113 = sbr.rel (%p1111) target = $region177
        $region174: #{custom-call.2} parent=162 // loop_body
          %v1114 = vld [vmem:[%s1108] sm:$0xff]
          %1115 = vst [vmem:[%s1109] sm:$0xff] %v1114
        $region175: #{custom-call.2} parent=162 // loop_footer
          %s1116 = scalar_lea.vmem %s1108, 8
          %s1117 = scalar_lea.vmem %s1109, 8
        $region176: #{custom-call.2} parent=162 // loop_footer_branch
          %1118 = sbr.rel target = $region172
        $region177: #{custom-call.2} parent=162 // loop_exit
          _
      $region163: #{custom-call.2} parent=158 // pred_fallthru
        _
      %s1120 = ssub.s32 16, 1
      %s1121 = smul.u32 0, 8
      %s1122 = scalar_lea.vmem %s6, %s1121
      %s1123 = smul.u32 0, 8
      %s1124 = scalar_lea.vmem [#allocation13], %s1123
      %v1125 = vld [vmem:[%s1124] sm:%s1120]
      %1126 = vst [vmem:[%s1122] sm:%s1120] %v1125
    $region159: #{custom-call.2} parent=1 // pred_fallthru
      _
    // Predicated region
    $region178: #{custom-call.2} parent=1 // pred_check
      _
    $region179: #{custom-call.2} parent=1 // pred_check_branch
      %1128 = sbr.rel (0) target = $region181
    $region180: #{custom-call.2} parent=1 // pred_region
      %p1130 = scmp.gt.s32.totalorder 0, 0
      // Predicated region
      $region182: #{custom-call.2} parent=180 // pred_check
        %p1131 = pneg %p1130
      $region183: #{custom-call.2} parent=180 // pred_check_branch
        %1133 = sbr.rel (%p1131) target = $region185
      $region184: #{custom-call.2} parent=180 // pred_region
        %s1134 = ssub.s32 0, 1
        %s1135 = smul.u32 %s1134, 8
        %s1136 = scalar_lea.vmem [#allocation15], %s1135
        %v1137 = vld [vmem:[#allocation15] sm:$0xff]
        // While loop
        $region186: #{custom-call.2} parent=184 // loop_pre_header
          _
        $region187: #{custom-call.2} parent=184 // loop_header
          %s1138 = sphi [#allocation15], %s1160
          %s1139 = sphi %s7, %s1161
          %v1140 = vphi %v1137, %v1162
          %s1141 = ssub.s32 %s1136, 64
          %p1142 = scmp.gt.s32.totalorder %s1138, %s1141
        $region188: #{custom-call.2} parent=184 // loop_header_branch
          %1144 = sbr.rel (%p1142) target = $region192
        $region189: #{custom-call.2} parent=184 // loop_body
          %1145 = vst [vmem:[%s1139] sm:$0xff] %v1140
          %v1146 = vld [vmem:[%s1138 + $0x8] sm:$0xff]
          %1147 = vst [vmem:[%s1139 + $0x8] sm:$0xff] %v1146
          %v1148 = vld [vmem:[%s1138 + $0x10] sm:$0xff]
          %1149 = vst [vmem:[%s1139 + $0x10] sm:$0xff] %v1148
          %v1150 = vld [vmem:[%s1138 + $0x18] sm:$0xff]
          %1151 = vst [vmem:[%s1139 + $0x18] sm:$0xff] %v1150
          %v1152 = vld [vmem:[%s1138 + $0x20] sm:$0xff]
          %1153 = vst [vmem:[%s1139 + $0x20] sm:$0xff] %v1152
          %v1154 = vld [vmem:[%s1138 + $0x28] sm:$0xff]
          %1155 = vst [vmem:[%s1139 + $0x28] sm:$0xff] %v1154
          %v1156 = vld [vmem:[%s1138 + $0x30] sm:$0xff]
          %1157 = vst [vmem:[%s1139 + $0x30] sm:$0xff] %v1156
          %v1158 = vld [vmem:[%s1138 + $0x38] sm:$0xff]
          %1159 = vst [vmem:[%s1139 + $0x38] sm:$0xff] %v1158
        $region190: #{custom-call.2} parent=184 // loop_footer
          %s1160 = scalar_lea.vmem %s1138, 64
          %s1161 = scalar_lea.vmem %s1139, 64
          %v1162 = vld [vmem:[%s1138 + $0x40] sm:$0xff]
        $region191: #{custom-call.2} parent=184 // loop_footer_branch
          %1163 = sbr.rel target = $region187
        $region192: #{custom-call.2} parent=184 // loop_exit
          _
        // While loop
        $region193: #{custom-call.2} parent=184 // loop_pre_header
          _
        $region194: #{custom-call.2} parent=184 // loop_header
          %s1164 = sphi %s1138, %s1172
          %s1165 = sphi %s1139, %s1173
          %v1166 = vphi %v1140, %v1166
          %p1167 = scmp.gt.s32.totalorder %s1164, %s1136
        $region195: #{custom-call.2} parent=184 // loop_header_branch
          %1169 = sbr.rel (%p1167) target = $region199
        $region196: #{custom-call.2} parent=184 // loop_body
          %v1170 = vld [vmem:[%s1164] sm:$0xff]
          %1171 = vst [vmem:[%s1165] sm:$0xff] %v1170
        $region197: #{custom-call.2} parent=184 // loop_footer
          %s1172 = scalar_lea.vmem %s1164, 8
          %s1173 = scalar_lea.vmem %s1165, 8
        $region198: #{custom-call.2} parent=184 // loop_footer_branch
          %1174 = sbr.rel target = $region194
        $region199: #{custom-call.2} parent=184 // loop_exit
          _
      $region185: #{custom-call.2} parent=180 // pred_fallthru
        _
      %s1176 = ssub.s32 16, 1
      %s1177 = smul.u32 0, 8
      %s1178 = scalar_lea.vmem %s7, %s1177
      %s1179 = smul.u32 0, 8
      %s1180 = scalar_lea.vmem [#allocation15], %s1179
      %v1181 = vld [vmem:[%s1180] sm:%s1176]
      %1182 = vst [vmem:[%s1178] sm:%s1176] %v1181
    $region181: #{custom-call.2} parent=1 // pred_fallthru
      _
    // Predicated region
    $region200: #{custom-call.2} parent=1 // pred_check
      _
    $region201: #{custom-call.2} parent=1 // pred_check_branch
      %1184 = sbr.rel (0) target = $region203
    $region202: #{custom-call.2} parent=1 // pred_region
      %p1186 = scmp.gt.s32.totalorder 0, 0
      // Predicated region
      $region204: #{custom-call.2} parent=202 // pred_check
        %p1187 = pneg %p1186
      $region205: #{custom-call.2} parent=202 // pred_check_branch
        %1189 = sbr.rel (%p1187) target = $region207
      $region206: #{custom-call.2} parent=202 // pred_region
        %s1190 = ssub.s32 0, 1
        %s1191 = smul.u32 %s1190, 8
        %s1192 = scalar_lea.vmem [#allocation17], %s1191
        %v1193 = vld [vmem:[#allocation17] sm:$0xff]
        // While loop
        $region208: #{custom-call.2} parent=206 // loop_pre_header
          _
        $region209: #{custom-call.2} parent=206 // loop_header
          %s1194 = sphi [#allocation17], %s1216
          %s1195 = sphi %s8, %s1217
          %v1196 = vphi %v1193, %v1218
          %s1197 = ssub.s32 %s1192, 64
          %p1198 = scmp.gt.s32.totalorder %s1194, %s1197
        $region210: #{custom-call.2} parent=206 // loop_header_branch
          %1200 = sbr.rel (%p1198) target = $region214
        $region211: #{custom-call.2} parent=206 // loop_body
          %1201 = vst [vmem:[%s1195] sm:$0xff] %v1196
          %v1202 = vld [vmem:[%s1194 + $0x8] sm:$0xff]
          %1203 = vst [vmem:[%s1195 + $0x8] sm:$0xff] %v1202
          %v1204 = vld [vmem:[%s1194 + $0x10] sm:$0xff]
          %1205 = vst [vmem:[%s1195 + $0x10] sm:$0xff] %v1204
          %v1206 = vld [vmem:[%s1194 + $0x18] sm:$0xff]
          %1207 = vst [vmem:[%s1195 + $0x18] sm:$0xff] %v1206
          %v1208 = vld [vmem:[%s1194 + $0x20] sm:$0xff]
          %1209 = vst [vmem:[%s1195 + $0x20] sm:$0xff] %v1208
          %v1210 = vld [vmem:[%s1194 + $0x28] sm:$0xff]
          %1211 = vst [vmem:[%s1195 + $0x28] sm:$0xff] %v1210
          %v1212 = vld [vmem:[%s1194 + $0x30] sm:$0xff]
          %1213 = vst [vmem:[%s1195 + $0x30] sm:$0xff] %v1212
          %v1214 = vld [vmem:[%s1194 + $0x38] sm:$0xff]
          %1215 = vst [vmem:[%s1195 + $0x38] sm:$0xff] %v1214
        $region212: #{custom-call.2} parent=206 // loop_footer
          %s1216 = scalar_lea.vmem %s1194, 64
          %s1217 = scalar_lea.vmem %s1195, 64
          %v1218 = vld [vmem:[%s1194 + $0x40] sm:$0xff]
        $region213: #{custom-call.2} parent=206 // loop_footer_branch
          %1219 = sbr.rel target = $region209
        $region214: #{custom-call.2} parent=206 // loop_exit
          _
        // While loop
        $region215: #{custom-call.2} parent=206 // loop_pre_header
          _
        $region216: #{custom-call.2} parent=206 // loop_header
          %s1220 = sphi %s1194, %s1228
          %s1221 = sphi %s1195, %s1229
          %v1222 = vphi %v1196, %v1222
          %p1223 = scmp.gt.s32.totalorder %s1220, %s1192
        $region217: #{custom-call.2} parent=206 // loop_header_branch
          %1225 = sbr.rel (%p1223) target = $region221
        $region218: #{custom-call.2} parent=206 // loop_body
          %v1226 = vld [vmem:[%s1220] sm:$0xff]
          %1227 = vst [vmem:[%s1221] sm:$0xff] %v1226
        $region219: #{custom-call.2} parent=206 // loop_footer
          %s1228 = scalar_lea.vmem %s1220, 8
          %s1229 = scalar_lea.vmem %s1221, 8
        $region220: #{custom-call.2} parent=206 // loop_footer_branch
          %1230 = sbr.rel target = $region216
        $region221: #{custom-call.2} parent=206 // loop_exit
          _
      $region207: #{custom-call.2} parent=202 // pred_fallthru
        _
      %s1232 = ssub.s32 16, 1
      %s1233 = smul.u32 0, 8
      %s1234 = scalar_lea.vmem %s8, %s1233
      %s1235 = smul.u32 0, 8
      %s1236 = scalar_lea.vmem [#allocation17], %s1235
      %v1237 = vld [vmem:[%s1236] sm:%s1232]
      %1238 = vst [vmem:[%s1234] sm:%s1232] %v1237
    $region203: #{custom-call.2} parent=1 // pred_fallthru
      _
    // Predicated region
    $region222: #{custom-call.2} parent=1 // pred_check
      _
    $region223: #{custom-call.2} parent=1 // pred_check_branch
      %1240 = sbr.rel (0) target = $region225
    $region224: #{custom-call.2} parent=1 // pred_region
      %p1242 = scmp.gt.s32.totalorder 0, 0
      // Predicated region
      $region226: #{custom-call.2} parent=224 // pred_check
        %p1243 = pneg %p1242
      $region227: #{custom-call.2} parent=224 // pred_check_branch
        %1245 = sbr.rel (%p1243) target = $region229
      $region228: #{custom-call.2} parent=224 // pred_region
        %s1246 = ssub.s32 0, 1
        %s1247 = smul.u32 %s1246, 8
        %s1248 = scalar_lea.vmem [#allocation19], %s1247
        %v1249 = vld [vmem:[#allocation19] sm:$0xff]
        // While loop
        $region230: #{custom-call.2} parent=228 // loop_pre_header
          _
        $region231: #{custom-call.2} parent=228 // loop_header
          %s1250 = sphi [#allocation19], %s1272
          %s1251 = sphi %s9, %s1273
          %v1252 = vphi %v1249, %v1274
          %s1253 = ssub.s32 %s1248, 64
          %p1254 = scmp.gt.s32.totalorder %s1250, %s1253
        $region232: #{custom-call.2} parent=228 // loop_header_branch
          %1256 = sbr.rel (%p1254) target = $region236
        $region233: #{custom-call.2} parent=228 // loop_body
          %1257 = vst [vmem:[%s1251] sm:$0xff] %v1252
          %v1258 = vld [vmem:[%s1250 + $0x8] sm:$0xff]
          %1259 = vst [vmem:[%s1251 + $0x8] sm:$0xff] %v1258
          %v1260 = vld [vmem:[%s1250 + $0x10] sm:$0xff]
          %1261 = vst [vmem:[%s1251 + $0x10] sm:$0xff] %v1260
          %v1262 = vld [vmem:[%s1250 + $0x18] sm:$0xff]
          %1263 = vst [vmem:[%s1251 + $0x18] sm:$0xff] %v1262
          %v1264 = vld [vmem:[%s1250 + $0x20] sm:$0xff]
          %1265 = vst [vmem:[%s1251 + $0x20] sm:$0xff] %v1264
          %v1266 = vld [vmem:[%s1250 + $0x28] sm:$0xff]
          %1267 = vst [vmem:[%s1251 + $0x28] sm:$0xff] %v1266
          %v1268 = vld [vmem:[%s1250 + $0x30] sm:$0xff]
          %1269 = vst [vmem:[%s1251 + $0x30] sm:$0xff] %v1268
          %v1270 = vld [vmem:[%s1250 + $0x38] sm:$0xff]
          %1271 = vst [vmem:[%s1251 + $0x38] sm:$0xff] %v1270
        $region234: #{custom-call.2} parent=228 // loop_footer
          %s1272 = scalar_lea.vmem %s1250, 64
          %s1273 = scalar_lea.vmem %s1251, 64
          %v1274 = vld [vmem:[%s1250 + $0x40] sm:$0xff]
        $region235: #{custom-call.2} parent=228 // loop_footer_branch
          %1275 = sbr.rel target = $region231
        $region236: #{custom-call.2} parent=228 // loop_exit
          _
        // While loop
        $region237: #{custom-call.2} parent=228 // loop_pre_header
          _
        $region238: #{custom-call.2} parent=228 // loop_header
          %s1276 = sphi %s1250, %s1284
          %s1277 = sphi %s1251, %s1285
          %v1278 = vphi %v1252, %v1278
          %p1279 = scmp.gt.s32.totalorder %s1276, %s1248
        $region239: #{custom-call.2} parent=228 // loop_header_branch
          %1281 = sbr.rel (%p1279) target = $region243
        $region240: #{custom-call.2} parent=228 // loop_body
          %v1282 = vld [vmem:[%s1276] sm:$0xff]
          %1283 = vst [vmem:[%s1277] sm:$0xff] %v1282
        $region241: #{custom-call.2} parent=228 // loop_footer
          %s1284 = scalar_lea.vmem %s1276, 8
          %s1285 = scalar_lea.vmem %s1277, 8
        $region242: #{custom-call.2} parent=228 // loop_footer_branch
          %1286 = sbr.rel target = $region238
        $region243: #{custom-call.2} parent=228 // loop_exit
          _
      $region229: #{custom-call.2} parent=224 // pred_fallthru
        _
      %s1288 = ssub.s32 16, 1
      %s1289 = smul.u32 0, 8
      %s1290 = scalar_lea.vmem %s9, %s1289
      %s1291 = smul.u32 0, 8
      %s1292 = scalar_lea.vmem [#allocation19], %s1291
      %v1293 = vld [vmem:[%s1292] sm:%s1288]
      %1294 = vst [vmem:[%s1290] sm:%s1288] %v1293
    $region225: #{custom-call.2} parent=1 // pred_fallthru
      _
    // Predicated region
    $region244: #{custom-call.2} parent=1 // pred_check
      _
    $region245: #{custom-call.2} parent=1 // pred_check_branch
      %1296 = sbr.rel (0) target = $region247
    $region246: #{custom-call.2} parent=1 // pred_region
      _
    $region247: #{custom-call.2} parent=1 // pred_fallthru
      _
    // Predicated region
    $region248: #{custom-call.2} parent=1 // pred_check
      _
    $region249: #{custom-call.2} parent=1 // pred_check_branch
      %1298 = sbr.rel (0) target = $region251
    $region250: #{custom-call.2} parent=1 // pred_region
      _
    $region251: #{custom-call.2} parent=1 // pred_fallthru
      _

// kernel: reverse
$region0: #{reverse}
  %s0 = inlined_call_operand.vmem [shape: f32[8,4], index: 0, kind: input, shape index: {}]
  %s1 = inlined_call_operand.vmem [shape: f32[8,4], index: 1, kind: output, shape index: {}]
  $region1: #{reverse} parent=0
    #allocation0 [shape = 'u8[8192]{0}', space=vmem, size = 0x2000, scoped, tag = 'operand span for operand 0']
    #allocation1 [shape = 'u8[4096]{0}', space=vmem, size = 0x1000, scoped, tag = 'packed  for operand 0']
    #allocation2 [shape = 'u8[4096]{0}', space=vmem, size = 0x1000, scoped, tag = 'operand span for operand 1']
    #allocation3 [shape = 'u8[2048]{0}', space=vmem, size = 0x800, scoped, tag = 'packed  for operand 1']
    %s2 = scalar_lea.vmem [#allocation1], 4
    // Predicated region
    $region2: #{reverse} parent=1 // pred_check
      _
    $region3: #{reverse} parent=1 // pred_check_branch
      %4 = sbr.rel (0) target = $region5
    $region4: #{reverse} parent=1 // pred_region
      // Predicated region
      $region6: #{reverse} parent=4 // pred_check
        _
      $region7: #{reverse} parent=4 // pred_check_branch
        %6 = sbr.rel target = $region9
      $region8: #{reverse} parent=4 // pred_region
        // Predicated region
        $region21: #{reverse} parent=8 // pred_check
          _
        $region22: #{reverse} parent=8 // pred_check_branch
          %22 = sbr.rel (0) target = $region24
        $region23: #{reverse} parent=8 // pred_region
          %s24 = ssub.s32 16, 1
          loop: start=0, step=1, limit=1
          $region25: #{reverse} parent=23 // loop_pre_header
            _
          $region26: #{reverse} parent=23 // loop_header
            %s26 = sphi 0, %s30
            %p27 = scmp.ge.s32.totalorder %s26, 1
            %s31 = sphi %s0, %s0
            %s32 = sphi %s2, %s2
          $region27: #{reverse} parent=23 // loop_header_branch
            %29 = sbr.rel (%p27) target = $region31
          $region28: #{reverse} parent=23 // loop_body
            %v33 = vld [vmem:[%s31] sm:%s24]
            %34 = vst [vmem:[%s32] sm:%s24] %v33
          $region29: #{reverse} parent=23 // loop_footer
            %s30 = sadd.s32 1, %s26
          $region30: #{reverse} parent=23 // loop_footer_branch
            %25 = sbr.rel target = $region26
          $region31: #{reverse} parent=23 // loop_exit
            _
        $region24: #{reverse} parent=8 // pred_fallthru
          _
      $region9: #{reverse} parent=4 // pred_fallthru
        _
      // Predicated region
      $region10: #{reverse} parent=4 // pred_check
        _
      $region11: #{reverse} parent=4 // pred_check_branch
        %8 = sbr.rel (0) target = $region13
      $region12: #{reverse} parent=4 // pred_region
        %s10 = ssub.s32 16, 1
        loop: start=0, step=1, limit=1
        $region14: #{reverse} parent=12 // loop_pre_header
          _
        $region15: #{reverse} parent=12 // loop_header
          %s12 = sphi 0, %s16
          %p13 = scmp.ge.s32.totalorder %s12, 1
          %s17 = sphi %s0, %s0
          %s18 = sphi %s2, %s2
        $region16: #{reverse} parent=12 // loop_header_branch
          %15 = sbr.rel (%p13) target = $region20
        $region17: #{reverse} parent=12 // loop_body
          %v19 = vld [vmem:[%s17] sm:%s10]
          %20 = vst [vmem:[%s18] sm:%s10] %v19
        $region18: #{reverse} parent=12 // loop_footer
          %s16 = sadd.s32 1, %s12
        $region19: #{reverse} parent=12 // loop_footer_branch
          %11 = sbr.rel target = $region15
        $region20: #{reverse} parent=12 // loop_exit
          _
      $region13: #{reverse} parent=4 // pred_fallthru
        _
    $region5: #{reverse} parent=1 // pred_fallthru
      _
    %35 = vnop
    %s37 = ssub.s32 16, 1
    %s38 = scalar_lea.vmem [#allocation1], 4
    %v39 = vld [vmem:[%s38] sm:%s37]
    %s40 = scalar_lea.vmem [#allocation0], 8
    %41 = vst [vmem:[%s40] sm:%s37] %v39
    %v42 = vld [vmem:[#allocation1] sm:%s37]
    %43 = vst [vmem:[#allocation0] sm:%s37] %v42
    %s44 = scalar_lea.vmem [#allocation0], 7
    %v45 = vld [vmem:[%s44] ss:$-1 sm:$0xff]
    %v46 = vrot.slane %v45, 4
    %47 = vst [vmem:[#allocation2] sm:$0xff] %v46
    %s48 = scalar_lea.vmem [#allocation0], 8
    %s49 = scalar_lea.vmem %s48, 7 [#allocation0]
    %v50 = vld [vmem:[%s49] ss:$-1 sm:$0xff]
    %v51 = vrot.slane %v50, 4
    %v52 = vlaneseq
    %v53 = vshrl.u32 %v52, 7
    %vm54 = vcmp.lt.s32.totalorder %v53, 4
    %55 = vst.msk [vmem:[#allocation2] sm:$0xff] %vm54, %v51
    %s57 = ssub.s32 16, 1
    %v58 = vld [vmem:[#allocation2] sm:%s57]
    %s60 = ssub.s32 16, 1
    %61 = vst [vmem:[#allocation3] sm:%s60] %v58
    // Predicated region
    $region32: #{reverse} parent=1 // pred_check
      _
    $region33: #{reverse} parent=1 // pred_check_branch
      %63 = sbr.rel (0) target = $region35
    $region34: #{reverse} parent=1 // pred_region
      // Predicated region
      $region36: #{reverse} parent=34 // pred_check
        _
      $region37: #{reverse} parent=34 // pred_check_branch
        %65 = sbr.rel target = $region39
      $region38: #{reverse} parent=34 // pred_region
        // Predicated region
        $region51: #{reverse} parent=38 // pred_check
          _
        $region52: #{reverse} parent=38 // pred_check_branch
          %81 = sbr.rel (0) target = $region54
        $region53: #{reverse} parent=38 // pred_region
          %s83 = ssub.s32 16, 1
          loop: start=0, step=1, limit=1
          $region55: #{reverse} parent=53 // loop_pre_header
            _
          $region56: #{reverse} parent=53 // loop_header
            %s85 = sphi 0, %s89
            %p86 = scmp.ge.s32.totalorder %s85, 1
            %s90 = sphi [#allocation3], [#allocation3]
            %s91 = sphi %s1, %s1
          $region57: #{reverse} parent=53 // loop_header_branch
            %88 = sbr.rel (%p86) target = $region61
          $region58: #{reverse} parent=53 // loop_body
            %v92 = vld [vmem:[%s90] sm:%s83]
            %93 = vst [vmem:[%s91] sm:%s83] %v92
          $region59: #{reverse} parent=53 // loop_footer
            %s89 = sadd.s32 1, %s85
          $region60: #{reverse} parent=53 // loop_footer_branch
            %84 = sbr.rel target = $region56
          $region61: #{reverse} parent=53 // loop_exit
            _
        $region54: #{reverse} parent=38 // pred_fallthru
          _
      $region39: #{reverse} parent=34 // pred_fallthru
        _
      // Predicated region
      $region40: #{reverse} parent=34 // pred_check
        _
      $region41: #{reverse} parent=34 // pred_check_branch
        %67 = sbr.rel (0) target = $region43
      $region42: #{reverse} parent=34 // pred_region
        %s69 = ssub.s32 16, 1
        loop: start=0, step=1, limit=1
        $region44: #{reverse} parent=42 // loop_pre_header
          _
        $region45: #{reverse} parent=42 // loop_header
          %s71 = sphi 0, %s75
          %p72 = scmp.ge.s32.totalorder %s71, 1
          %s76 = sphi [#allocation3], [#allocation3]
          %s77 = sphi %s1, %s1
        $region46: #{reverse} parent=42 // loop_header_branch
          %74 = sbr.rel (%p72) target = $region50
        $region47: #{reverse} parent=42 // loop_body
          %v78 = vld [vmem:[%s76] sm:%s69]
          %79 = vst [vmem:[%s77] sm:%s69] %v78
        $region48: #{reverse} parent=42 // loop_footer
          %s75 = sadd.s32 1, %s71
        $region49: #{reverse} parent=42 // loop_footer_branch
          %70 = sbr.rel target = $region45
        $region50: #{reverse} parent=42 // loop_exit
          _
      $region43: #{reverse} parent=34 // pred_fallthru
        _
    $region35: #{reverse} parent=1 // pred_fallthru
      _
    %94 = vnop

// kernel: reverse.1
$region0: #{reverse.1}
  %s0 = inlined_call_operand.vmem [shape: f32[4], index: 0, kind: input, shape index: {}]
  %s1 = inlined_call_operand.vmem [shape: f32[4], index: 1, kind: output, shape index: {}]
  %v2 = vlaneseq
  %v3 = vsub.s32 3, %v2
  %4 = vset.pattern.permute.xlu0 %v3
  $region1: #{reverse.1} parent=0
    #allocation0 [shape = 'u8[8192]{0}', space=vmem, size = 0x2000, scoped, tag = 'operand span for operand 0']
    #allocation1 [shape = 'u8[1024]{0}', space=vmem, size = 0x400, scoped, tag = 'packed  for operand 0']
    #allocation2 [shape = 'u8[4096]{0}', space=vmem, size = 0x1000, scoped, tag = 'operand span for operand 1']
    #allocation3 [shape = 'u8[512]{0}', space=vmem, size = 0x400, scoped, tag = 'packed  for operand 1']
    %s5 = scalar_lea.vmem [#allocation1], 1
    // Predicated region
    $region2: #{reverse.1} parent=1 // pred_check
      _
    $region3: #{reverse.1} parent=1 // pred_check_branch
      %7 = sbr.rel (0) target = $region5
    $region4: #{reverse.1} parent=1 // pred_region
      // Predicated region
      $region6: #{reverse.1} parent=4 // pred_check
        _
      $region7: #{reverse.1} parent=4 // pred_check_branch
        %9 = sbr.rel target = $region9
      $region8: #{reverse.1} parent=4 // pred_region
        // Predicated region
        $region21: #{reverse.1} parent=8 // pred_check
          _
        $region22: #{reverse.1} parent=8 // pred_check_branch
          %25 = sbr.rel (0) target = $region24
        $region23: #{reverse.1} parent=8 // pred_region
          %s27 = ssub.s32 2, 1
          loop: start=0, step=1, limit=1
          $region25: #{reverse.1} parent=23 // loop_pre_header
            _
          $region26: #{reverse.1} parent=23 // loop_header
            %s29 = sphi 0, %s33
            %p30 = scmp.ge.s32.totalorder %s29, 1
            %s34 = sphi %s0, %s0
            %s35 = sphi %s5, %s5
          $region27: #{reverse.1} parent=23 // loop_header_branch
            %32 = sbr.rel (%p30) target = $region31
          $region28: #{reverse.1} parent=23 // loop_body
            %v36 = vld [vmem:[%s34] sm:%s27]
            %37 = vst [vmem:[%s35] sm:%s27] %v36
          $region29: #{reverse.1} parent=23 // loop_footer
            %s33 = sadd.s32 1, %s29
          $region30: #{reverse.1} parent=23 // loop_footer_branch
            %28 = sbr.rel target = $region26
          $region31: #{reverse.1} parent=23 // loop_exit
            _
        $region24: #{reverse.1} parent=8 // pred_fallthru
          _
      $region9: #{reverse.1} parent=4 // pred_fallthru
        _
      // Predicated region
      $region10: #{reverse.1} parent=4 // pred_check
        _
      $region11: #{reverse.1} parent=4 // pred_check_branch
        %11 = sbr.rel (0) target = $region13
      $region12: #{reverse.1} parent=4 // pred_region
        %s13 = ssub.s32 2, 1
        loop: start=0, step=1, limit=1
        $region14: #{reverse.1} parent=12 // loop_pre_header
          _
        $region15: #{reverse.1} parent=12 // loop_header
          %s15 = sphi 0, %s19
          %p16 = scmp.ge.s32.totalorder %s15, 1
          %s20 = sphi %s0, %s0
          %s21 = sphi %s5, %s5
        $region16: #{reverse.1} parent=12 // loop_header_branch
          %18 = sbr.rel (%p16) target = $region20
        $region17: #{reverse.1} parent=12 // loop_body
          %v22 = vld [vmem:[%s20] sm:%s13]
          %23 = vst [vmem:[%s21] sm:%s13] %v22
        $region18: #{reverse.1} parent=12 // loop_footer
          %s19 = sadd.s32 1, %s15
        $region19: #{reverse.1} parent=12 // loop_footer_branch
          %14 = sbr.rel target = $region15
        $region20: #{reverse.1} parent=12 // loop_exit
          _
      $region13: #{reverse.1} parent=4 // pred_fallthru
        _
    $region5: #{reverse.1} parent=1 // pred_fallthru
      _
    %38 = vnop
    %s40 = ssub.s32 2, 1
    %s41 = scalar_lea.vmem [#allocation1], 1
    %v42 = vld [vmem:[%s41] sm:%s40]
    %s43 = scalar_lea.vmem [#allocation0], 8
    %44 = vst [vmem:[%s43] sm:%s40] %v42
    %v45 = vld [vmem:[#allocation1] sm:%s40]
    %46 = vst [vmem:[#allocation0] sm:%s40] %v45
    %s47 = scalar_lea.vmem [#allocation0], 7
    %v48 = vld [vmem:[%s47] ss:$-1 sm:$0xff]
    %v49 = vrot.slane %v48, 7
    %50 = vperm.xlu0 %4, %v49
    %v51 = vpop.permute.xlu0 %50
    %52 = vst [vmem:[#allocation2] sm:$0xff] %v51
    %s53 = scalar_lea.vmem [#allocation0], 8
    %s54 = scalar_lea.vmem %s53, 7 [#allocation0]
    %v55 = vld [vmem:[%s54] ss:$-1 sm:$0xff]
    %v56 = vrot.slane %v55, 7
    %57 = vperm.xlu0 %4, %v56
    %v58 = vpop.permute.xlu0 %57
    %v59 = vlaneseq
    %v60 = vshrl.u32 %v59, 7
    %vm61 = vcmp.lt.s32.totalorder %v60, 1
    %62 = vst.msk [vmem:[#allocation2] sm:$0xff] %vm61, %v58
    %s64 = ssub.s32 2, 1
    %v65 = vld [vmem:[#allocation2] sm:%s64]
    %s67 = ssub.s32 2, 1
    %68 = vst [vmem:[#allocation3] sm:%s67] %v65
    // Predicated region
    $region32: #{reverse.1} parent=1 // pred_check
      _
    $region33: #{reverse.1} parent=1 // pred_check_branch
      %70 = sbr.rel (0) target = $region35
    $region34: #{reverse.1} parent=1 // pred_region
      // Predicated region
      $region36: #{reverse.1} parent=34 // pred_check
        _
      $region37: #{reverse.1} parent=34 // pred_check_branch
        %72 = sbr.rel target = $region39
      $region38: #{reverse.1} parent=34 // pred_region
        // Predicated region
        $region51: #{reverse.1} parent=38 // pred_check
          _
        $region52: #{reverse.1} parent=38 // pred_check_branch
          %88 = sbr.rel (0) target = $region54
        $region53: #{reverse.1} parent=38 // pred_region
          %s90 = ssub.s32 2, 1
          loop: start=0, step=1, limit=1
          $region55: #{reverse.1} parent=53 // loop_pre_header
            _
          $region56: #{reverse.1} parent=53 // loop_header
            %s92 = sphi 0, %s96
            %p93 = scmp.ge.s32.totalorder %s92, 1
            %s97 = sphi [#allocation3], [#allocation3]
            %s98 = sphi %s1, %s1
          $region57: #{reverse.1} parent=53 // loop_header_branch
            %95 = sbr.rel (%p93) target = $region61
          $region58: #{reverse.1} parent=53 // loop_body
            %v99 = vld [vmem:[%s97] sm:%s90]
            %100 = vst [vmem:[%s98] sm:%s90] %v99
          $region59: #{reverse.1} parent=53 // loop_footer
            %s96 = sadd.s32 1, %s92
          $region60: #{reverse.1} parent=53 // loop_footer_branch
            %91 = sbr.rel target = $region56
          $region61: #{reverse.1} parent=53 // loop_exit
            _
        $region54: #{reverse.1} parent=38 // pred_fallthru
          _
      $region39: #{reverse.1} parent=34 // pred_fallthru
        _
      // Predicated region
      $region40: #{reverse.1} parent=34 // pred_check
        _
      $region41: #{reverse.1} parent=34 // pred_check_branch
        %74 = sbr.rel (0) target = $region43
      $region42: #{reverse.1} parent=34 // pred_region
        %s76 = ssub.s32 2, 1
        loop: start=0, step=1, limit=1
        $region44: #{reverse.1} parent=42 // loop_pre_header
          _
        $region45: #{reverse.1} parent=42 // loop_header
          %s78 = sphi 0, %s82
          %p79 = scmp.ge.s32.totalorder %s78, 1
          %s83 = sphi [#allocation3], [#allocation3]
          %s84 = sphi %s1, %s1
        $region46: #{reverse.1} parent=42 // loop_header_branch
          %81 = sbr.rel (%p79) target = $region50
        $region47: #{reverse.1} parent=42 // loop_body
          %v85 = vld [vmem:[%s83] sm:%s76]
          %86 = vst [vmem:[%s84] sm:%s76] %v85
        $region48: #{reverse.1} parent=42 // loop_footer
          %s82 = sadd.s32 1, %s78
        $region49: #{reverse.1} parent=42 // loop_footer_branch
          %77 = sbr.rel target = $region45
        $region50: #{reverse.1} parent=42 // loop_exit
          _
      $region43: #{reverse.1} parent=34 // pred_fallthru
        _
    $region35: #{reverse.1} parent=1 // pred_fallthru
      _
    %101 = vnop

// kernel: _pca_whiten.2
$region0: #{_pca_whiten.2}
  #allocation0 [shape = 'u32[]', space=smem, size = 0x4, offset = 0x4, fixed_abs, tag = 'smem constant byte address 0x4 - core index']
  #allocation1 [shape = 'u32[72,128]{1,0:T(1,128)}', space=vmem, size = 0x9000, scoped, tag = 'internal scratch']
  %s0 = inlined_call_operand.vmem [shape: bf16[8,512], index: 0, kind: input, shape index: {}]
  %s1 = inlined_call_operand.vmem [shape: f32[8,1], index: 1, kind: input, shape index: {}]
  %s2 = inlined_call_operand.vmem [shape: f32[1,8,1], index: 2, kind: output, shape index: {0}]
  %s3 = inlined_call_operand.vmem [shape: f32[1,8,8], index: 3, kind: output, shape index: {1}]
  %4 = xla_tuple %s2, %s3
  %s5 = sld [smem:[#allocation0]]
  $region30: #{_pca_whiten.2} parent=0
    _
  %s7 = ssub.s32 1, %s5
  %s8 = scalar_select 0, %s7, %s5
  // Predicated region
  $region2: #{_pca_whiten.2} parent=0 // pred_check
    _
  $region3: #{_pca_whiten.2} parent=0 // pred_check_branch
    %10 = sbr.rel (0) target = $region5
  $region4: #{_pca_whiten.2} parent=0 // pred_region
    %s11 = sadd.s32 0, 0
    %s12 = smul.u32 4, %s11
    %p13 = scmp.lt.s32.totalorder %s12, 3
    %s14 = scalar_select %p13, %s12, 3
    %s15 = smul.addr %s14, 4
    %s16 = scalar_lea.vmem %s0, %s15
    %s17 = sadd.s32 0, 0
    %s18 = smul.u32 4, %s17
  $region5: #{_pca_whiten.2} parent=0 // pred_fallthru
    _
  // Predicated region
  $region6: #{_pca_whiten.2} parent=0 // pred_check
    _
  $region7: #{_pca_whiten.2} parent=0 // pred_check_branch
    %20 = sbr.rel (0) target = $region9
  $region8: #{_pca_whiten.2} parent=0 // pred_region
    _
  $region9: #{_pca_whiten.2} parent=0 // pred_fallthru
    _
  %s21 = sadd.s32 0, 0
  %s22 = smul.u32 4, %s21
  %p23 = scmp.lt.s32.totalorder %s22, 3
  %s24 = scalar_select %p23, %s22, 3
  %s25 = smul.addr %s24, 4
  %s26 = scalar_lea.vmem %s0, %s25
  %s27 = sadd.s32 0, 0
  %s28 = smul.u32 4, %s27
  %p29 = scmp.lt.s32.totalorder %s28, 3
  %s30 = scalar_select %p29, %s28, 3
  %s31 = smul.addr %s30, 4
  %s32 = scalar_lea.vmem %s0, %s31
  %s33 = sadd.s32 0, 0
  %s34 = smul.u32 4, %s33
  %p35 = scmp.eq.s32.totalorder 0, 0
  // Predicated region
  $region10: #{_pca_whiten.2} parent=0 // pred_check
    %p36 = pneg %p35
  $region11: #{_pca_whiten.2} parent=0 // pred_check_branch
    %38 = sbr.rel (%p36) target = $region13
  $region12: #{_pca_whiten.2} parent=0 // pred_region
    %vm39 = vcmask 7168
    %40 = vst.msk [vmem:[%s2] sm:$0xff] %vm39, 0.0
    %vm41 = vcmask 64512
    %42 = vst.msk [vmem:[%s3] sm:$0xff] %vm41, 0.0
  $region13: #{_pca_whiten.2} parent=0 // pred_fallthru
    _
  %v43 = vld [vmem:[%s32] sm:$0xff]
  %v44 = vld [vmem:[%s32 + $0x8] sm:$0xff]
  %v45 = vunpack.c.l.bf16 %v43
  %v46 = vunpack.c.h.bf16 %v43
  %v47 = vunpack.c.l.bf16 %v44
  %v48 = vunpack.c.h.bf16 %v44
  %v49 = vld [vmem:[%s1] sm:$0xff]
  %51 = vset.pattern.permute.xlu0 0
  %52 = vperm.xlu0 %51, %v49
  %v53 = vpop.permute.xlu0 %52
  %v55 = vsub.f32 %v45, %v53
  %v56 = vsub.f32 %v46, %v53
  %v57 = vsub.f32 %v47, %v53
  %v58 = vsub.f32 %v48, %v53
  %v59 = vld [vmem:[%s2] sm:$0xff]
  %v60 = vadd.f32 %v55, %v56
  %v61 = vadd.f32 %v60, %v57
  %v62 = vadd.f32 %v61, %v58
  %63 = vadd.xlane.f32.xlu0 %v62
  %v64 = vpop.xlane.xlu0 %63
  %v65 = vadd.f32 %v59, %v64
  %vm66 = vcmask 7168
  %67 = vst.msk [vmem:[%s2] sm:$0xff] %vm66, %v65
  %v68 = vld [vmem:[%s3] sm:$0xff]
  %69 = vmatpush.xpose.msra.mxu0 0.0
  %70 = vmatpush.xpose.msra.mxu0 0.0
  %71 = vmatpush.xpose.msra.mxu0 0.0
  %72 = vmatpush.xpose.msra.mxu0 0.0
  %73 = vmatpush.xpose.msra.mxu0 0.0
  %74 = vmatpush.xpose.msra.mxu0 0.0
  %75 = vmatpush.xpose.msra.mxu0 0.0
  %76 = vmatpush.xpose.msra.mxu0 0.0
  %77 = vmatpush.xpose.msra.mxu0 0.0
  %78 = vmatpush.xpose.msra.mxu0 0.0
  %79 = vmatpush.xpose.msra.mxu0 0.0
  %80 = vmatpush.xpose.msra.mxu0 0.0
  %81 = vmatpush.xpose.msra.mxu0 0.0
  %82 = vmatpush.xpose.msra.mxu0 0.0
  %83 = vmatpush.xpose.msra.mxu0 0.0
  %84 = vmatpush.xpose.msra.mxu0 %v55
  %85 = vmatmul.f32.gmra.mxu0 %v55
  %v86 = vpop.f32.mrf.mxu0
  %v87 = vadd.f32 0.0, %v86
  %88 = vdwg.mxu0
  %89 = vmatpush.xpose.msra.mxu0 0.0
  %90 = vmatpush.xpose.msra.mxu0 0.0
  %91 = vmatpush.xpose.msra.mxu0 0.0
  %92 = vmatpush.xpose.msra.mxu0 0.0
  %93 = vmatpush.xpose.msra.mxu0 0.0
  %94 = vmatpush.xpose.msra.mxu0 0.0
  %95 = vmatpush.xpose.msra.mxu0 0.0
  %96 = vmatpush.xpose.msra.mxu0 0.0
  %97 = vmatpush.xpose.msra.mxu0 0.0
  %98 = vmatpush.xpose.msra.mxu0 0.0
  %99 = vmatpush.xpose.msra.mxu0 0.0
  %100 = vmatpush.xpose.msra.mxu0 0.0
  %101 = vmatpush.xpose.msra.mxu0 0.0
  %102 = vmatpush.xpose.msra.mxu0 0.0
  %103 = vmatpush.xpose.msra.mxu0 0.0
  %104 = vmatpush.xpose.msra.mxu0 %v56
  %105 = vmatmul.f32.gmra.mxu0 %v56
  %v106 = vpop.f32.mrf.mxu0
  %v107 = vadd.f32 %v87, %v106
  %108 = vdwg.mxu0
  %109 = vmatpush.xpose.msra.mxu0 0.0
  %110 = vmatpush.xpose.msra.mxu0 0.0
  %111 = vmatpush.xpose.msra.mxu0 0.0
  %112 = vmatpush.xpose.msra.mxu0 0.0
  %113 = vmatpush.xpose.msra.mxu0 0.0
  %114 = vmatpush.xpose.msra.mxu0 0.0
  %115 = vmatpush.xpose.msra.mxu0 0.0
  %116 = vmatpush.xpose.msra.mxu0 0.0
  %117 = vmatpush.xpose.msra.mxu0 0.0
  %118 = vmatpush.xpose.msra.mxu0 0.0
  %119 = vmatpush.xpose.msra.mxu0 0.0
  %120 = vmatpush.xpose.msra.mxu0 0.0
  %121 = vmatpush.xpose.msra.mxu0 0.0
  %122 = vmatpush.xpose.msra.mxu0 0.0
  %123 = vmatpush.xpose.msra.mxu0 0.0
  %124 = vmatpush.xpose.msra.mxu0 %v57
  %125 = vmatmul.f32.gmra.mxu0 %v57
  %v126 = vpop.f32.mrf.mxu0
  %v127 = vadd.f32 %v107, %v126
  %128 = vdwg.mxu0
  %129 = vmatpush.xpose.msra.mxu0 0.0
  %130 = vmatpush.xpose.msra.mxu0 0.0
  %131 = vmatpush.xpose.msra.mxu0 0.0
  %132 = vmatpush.xpose.msra.mxu0 0.0
  %133 = vmatpush.xpose.msra.mxu0 0.0
  %134 = vmatpush.xpose.msra.mxu0 0.0
  %135 = vmatpush.xpose.msra.mxu0 0.0
  %136 = vmatpush.xpose.msra.mxu0 0.0
  %137 = vmatpush.xpose.msra.mxu0 0.0
  %138 = vmatpush.xpose.msra.mxu0 0.0
  %139 = vmatpush.xpose.msra.mxu0 0.0
  %140 = vmatpush.xpose.msra.mxu0 0.0
  %141 = vmatpush.xpose.msra.mxu0 0.0
  %142 = vmatpush.xpose.msra.mxu0 0.0
  %143 = vmatpush.xpose.msra.mxu0 0.0
  %144 = vmatpush.xpose.msra.mxu0 %v58
  %145 = vmatmul.f32.gmra.mxu0 %v58
  %v146 = vpop.f32.mrf.mxu0
  %v147 = vadd.f32 %v127, %v146
  %148 = vdwg.mxu0
  %v149 = vadd.f32 %v68, %v147
  %vm150 = vcmask 64512
  %151 = vst.msk [vmem:[%s3] sm:$0xff] %vm150, %v149
  // Predicated region
  $region14: #{_pca_whiten.2} parent=0 // pred_check
    _
  $region15: #{_pca_whiten.2} parent=0 // pred_check_branch
    %153 = sbr.rel (0) target = $region17
  $region16: #{_pca_whiten.2} parent=0 // pred_region
    _
  $region17: #{_pca_whiten.2} parent=0 // pred_fallthru
    _
  // Predicated region
  $region18: #{_pca_whiten.2} parent=0 // pred_check
    _
  $region19: #{_pca_whiten.2} parent=0 // pred_check_branch
    %155 = sbr.rel (0) target = $region21
  $region20: #{_pca_whiten.2} parent=0 // pred_region
    _
  $region21: #{_pca_whiten.2} parent=0 // pred_fallthru
    _
  // Predicated region
  $region22: #{_pca_whiten.2} parent=0 // pred_check
    _
  $region23: #{_pca_whiten.2} parent=0 // pred_check_branch
    %157 = sbr.rel (0) target = $region25
  $region24: #{_pca_whiten.2} parent=0 // pred_region
    _
  $region25: #{_pca_whiten.2} parent=0 // pred_fallthru
    _
  // Predicated region
  $region26: #{_pca_whiten.2} parent=0 // pred_check
    _
  $region27: #{_pca_whiten.2} parent=0 // pred_check_branch
    %159 = sbr.rel (0) target = $region29
  $region28: #{_pca_whiten.2} parent=0 // pred_region
    _
  $region29: #{_pca_whiten.2} parent=0 // pred_fallthru
    _

// kernel: _pca_whiten.3
$region0: #{_pca_whiten.3}
  #allocation0 [shape = 'u32[]', space=smem, size = 0x4, offset = 0x4, fixed_abs, tag = 'smem constant byte address 0x4 - core index']
  #allocation1 [shape = 'u32[72,128]{1,0:T(1,128)}', space=vmem, size = 0x9000, scoped, tag = 'internal scratch']
  %s0 = inlined_call_operand.vmem [shape: bf16[8,512], index: 0, kind: input, shape index: {}]
  %s1 = inlined_call_operand.vmem [shape: f32[8,1], index: 1, kind: input, shape index: {}]
  %s2 = inlined_call_operand.vmem [shape: f32[4,8], index: 2, kind: input, shape index: {}]
  %s3 = inlined_call_operand.hbm [shape: bf16[4,512], index: 3, kind: output, shape index: {0}]
  %s4 = inlined_call_operand.hbm [shape: f32[1,4,4], index: 4, kind: output, shape index: {1}]
  %5 = xla_tuple %s3, %s4
  %s6 = sld [smem:[#allocation0]]
  $region34: #{_pca_whiten.3} parent=0
    _
  %s8 = ssub.s32 1, %s6
  %s9 = scalar_select 0, %s8, %s6
  $region1: #{_pca_whiten.3} parent=0
    #allocation2 [shape = 'u8[4096]{0}', space=vmem, size = 0x1000, scoped, tag = 'output window, operand 0, single buffered']
    #allocation3 [shape = 's32[1]{0}', space=sflag, size = 0x4, scoped, tag = 'scoped memory for _pca_whiten.3']
    #allocation4 [shape = 'u8[2048]{0}', space=vmem, size = 0x800, scoped, tag = 'output window, operand 1, single buffered']
    #allocation5 [shape = 's32[1]{0}', space=sflag, size = 0x4, scoped, tag = 'scoped memory for _pca_whiten.3']
    %10 = vsyncpa [#allocation3], 0
    %11 = vsyncpa [#allocation5], 0
    // Predicated region
    $region2: #{_pca_whiten.3} parent=1 // pred_check
      _
    $region3: #{_pca_whiten.3} parent=1 // pred_check_branch
      %13 = sbr.rel (0) target = $region5
    $region4: #{_pca_whiten.3} parent=1 // pred_region
      %s14 = sadd.s32 0, 0
      %s15 = smul.u32 4, %s14
      %p16 = scmp.lt.s32.totalorder %s15, 3
      %s17 = scalar_select %p16, %s15, 3
      %s18 = smul.addr %s17, 4
      %s19 = scalar_lea.vmem %s0, %s18
      %s20 = sadd.s32 0, 0
      %s21 = smul.u32 4, %s20
    $region5: #{_pca_whiten.3} parent=1 // pred_fallthru
      _
    // Predicated region
    $region6: #{_pca_whiten.3} parent=1 // pred_check
      _
    $region7: #{_pca_whiten.3} parent=1 // pred_check_branch
      %23 = sbr.rel (0) target = $region9
    $region8: #{_pca_whiten.3} parent=1 // pred_region
      _
    $region9: #{_pca_whiten.3} parent=1 // pred_fallthru
      _
    // Predicated region
    $region10: #{_pca_whiten.3} parent=1 // pred_check
      _
    $region11: #{_pca_whiten.3} parent=1 // pred_check_branch
      %25 = sbr.rel (0) target = $region13
    $region12: #{_pca_whiten.3} parent=1 // pred_region
      _
    $region13: #{_pca_whiten.3} parent=1 // pred_fallthru
      _
    %s26 = sadd.s32 0, 0
    %s27 = smul.u32 4, %s26
    %p28 = scmp.lt.s32.totalorder %s27, 3
    %s29 = scalar_select %p28, %s27, 3
    %s30 = smul.addr %s29, 4
    %s31 = scalar_lea.vmem %s0, %s30
    %s32 = sadd.s32 0, 0
    %s33 = smul.u32 4, %s32
    %p34 = scmp.lt.s32.totalorder %s33, 3
    %s35 = scalar_select %p34, %s33, 3
    %s36 = smul.addr %s35, 4
    %s37 = scalar_lea.vmem %s0, %s36
    %s38 = sadd.s32 0, 0
    %s39 = smul.u32 4, %s38
    %s40 = sadd.s32 0, 0
    %s41 = smul.u32 4, %s40
    %p42 = scmp.eq.s32.totalorder 0, 0
    // Predicated region
    $region14: #{_pca_whiten.3} parent=1 // pred_check
      %p43 = pneg %p42
    $region15: #{_pca_whiten.3} parent=1 // pred_check_branch
      %45 = sbr.rel (%p43) target = $region17
    $region16: #{_pca_whiten.3} parent=1 // pred_region
      %vm46 = vcmask 27648
      %47 = vst.msk [vmem:[#allocation4] sm:$0xf] %vm46, 0.0
    $region17: #{_pca_whiten.3} parent=1 // pred_fallthru
      _
    %s48 = sadd.s32 0, 0
    %s49 = smul.u32 %s48, 512
    %v50 = vld [vmem:[%s37] sm:$0xff]
    %v51 = vld [vmem:[%s37 + $0x8] sm:$0xff]
    %v52 = vunpack.c.l.bf16 %v50
    %v53 = vunpack.c.h.bf16 %v50
    %v54 = vunpack.c.l.bf16 %v51
    %v55 = vunpack.c.h.bf16 %v51
    %v56 = vlaneseq
    %v57 = vand.u32 %v56, 127
    %v58 = vadd.s32 %v57, 128
    %v59 = vadd.s32 %v57, 256
    %v60 = vadd.s32 %v57, 384
    %v61 = vstv %s49
    %v62 = vadd.s32 %v61, %v57
    %v63 = vadd.s32 %v61, %v58
    %v64 = vadd.s32 %v61, %v59
    %v65 = vadd.s32 %v61, %v60
    %vm66 = vcmp.lt.s32.totalorder %v62, 512
    %vm67 = vcmp.lt.s32.totalorder %v63, 512
    %vm68 = vcmp.lt.s32.totalorder %v64, 512
    %vm69 = vcmp.lt.s32.totalorder %v65, 512
    %v70 = vld [vmem:[%s1] sm:$0xff]
    %72 = vset.pattern.permute.xlu0 0
    %73 = vperm.xlu0 %72, %v70
    %v74 = vpop.permute.xlu0 %73
    %v76 = vsub.f32 %v52, %v74
    %v77 = vsub.f32 %v53, %v74
    %v78 = vsub.f32 %v54, %v74
    %v79 = vsub.f32 %v55, %v74
    %v80 = vsel %vm66, %v76, 0.0
    %v81 = vsel %vm67, %v77, 0.0
    %v82 = vsel %vm68, %v78, 0.0
    %v83 = vsel %vm69, %v79, 0.0
    %v84 = vld [vmem:[%s2] sm:$0xf]
    %vm85 = vcmask 64512
    %v87 = vsel %vm85, %v84, 0
    %89 = vmatpush.msra.mxu0 0.0
    %90 = vmatpush.msra.mxu0 0.0
    %91 = vmatpush.msra.mxu0 0.0
    %92 = vmatpush.msra.mxu0 0.0
    %93 = vmatpush.msra.mxu0 0.0
    %94 = vmatpush.msra.mxu0 0.0
    %95 = vmatpush.msra.mxu0 0.0
    %96 = vmatpush.msra.mxu0 0.0
    %97 = vmatpush.msra.mxu0 0.0
    %98 = vmatpush.msra.mxu0 0.0
    %99 = vmatpush.msra.mxu0 0.0
    %100 = vmatpush.msra.mxu0 0.0
    %101 = vmatpush.msra.mxu0 0.0
    %102 = vmatpush.msra.mxu0 0.0
    %103 = vmatpush.msra.mxu0 0.0
    %104 = vmatpush.msra.mxu0 %v80
    %105 = vmatmul.f32.gmra.mxu0 %v87
    %v106 = vpop.f32.mrf.mxu0
    %v107 = vadd.f32 0.0, %v106
    %108 = vdwg.mxu0
    %109 = vmatpush.msra.mxu0 0.0
    %110 = vmatpush.msra.mxu0 0.0
    %111 = vmatpush.msra.mxu0 0.0
    %112 = vmatpush.msra.mxu0 0.0
    %113 = vmatpush.msra.mxu0 0.0
    %114 = vmatpush.msra.mxu0 0.0
    %115 = vmatpush.msra.mxu0 0.0
    %116 = vmatpush.msra.mxu0 0.0
    %117 = vmatpush.msra.mxu0 0.0
    %118 = vmatpush.msra.mxu0 0.0
    %119 = vmatpush.msra.mxu0 0.0
    %120 = vmatpush.msra.mxu0 0.0
    %121 = vmatpush.msra.mxu0 0.0
    %122 = vmatpush.msra.mxu0 0.0
    %123 = vmatpush.msra.mxu0 0.0
    %124 = vmatpush.msra.mxu0 %v81
    %125 = vmatmul.f32.gmra.mxu0 %v87
    %v126 = vpop.f32.mrf.mxu0
    %v127 = vadd.f32 0.0, %v126
    %128 = vdwg.mxu0
    %129 = vmatpush.msra.mxu0 0.0
    %130 = vmatpush.msra.mxu0 0.0
    %131 = vmatpush.msra.mxu0 0.0
    %132 = vmatpush.msra.mxu0 0.0
    %133 = vmatpush.msra.mxu0 0.0
    %134 = vmatpush.msra.mxu0 0.0
    %135 = vmatpush.msra.mxu0 0.0
    %136 = vmatpush.msra.mxu0 0.0
    %137 = vmatpush.msra.mxu0 0.0
    %138 = vmatpush.msra.mxu0 0.0
    %139 = vmatpush.msra.mxu0 0.0
    %140 = vmatpush.msra.mxu0 0.0
    %141 = vmatpush.msra.mxu0 0.0
    %142 = vmatpush.msra.mxu0 0.0
    %143 = vmatpush.msra.mxu0 0.0
    %144 = vmatpush.msra.mxu0 %v82
    %145 = vmatmul.f32.gmra.mxu0 %v87
    %v146 = vpop.f32.mrf.mxu0
    %v147 = vadd.f32 0.0, %v146
    %148 = vdwg.mxu0
    %149 = vmatpush.msra.mxu0 0.0
    %150 = vmatpush.msra.mxu0 0.0
    %151 = vmatpush.msra.mxu0 0.0
    %152 = vmatpush.msra.mxu0 0.0
    %153 = vmatpush.msra.mxu0 0.0
    %154 = vmatpush.msra.mxu0 0.0
    %155 = vmatpush.msra.mxu0 0.0
    %156 = vmatpush.msra.mxu0 0.0
    %157 = vmatpush.msra.mxu0 0.0
    %158 = vmatpush.msra.mxu0 0.0
    %159 = vmatpush.msra.mxu0 0.0
    %160 = vmatpush.msra.mxu0 0.0
    %161 = vmatpush.msra.mxu0 0.0
    %162 = vmatpush.msra.mxu0 0.0
    %163 = vmatpush.msra.mxu0 0.0
    %164 = vmatpush.msra.mxu0 %v83
    %165 = vmatmul.f32.gmra.mxu0 %v87
    %v166 = vpop.f32.mrf.mxu0
    %v167 = vadd.f32 0.0, %v166
    %168 = vdwg.mxu0
    %v169 = vpack.c.bf16 %v127, %v107
    %v170 = vpack.c.bf16 %v167, %v147
    %v173 = vrot.slane %v169, 2
    %v174 = vrot.slane %v170, 4
    %v175 = vrot.slane %v170, 6
    %vm176 = vcmask 1041408
    %v179 = vsel %vm176, %v169, %v173
    %vm180 = vcmask 1045508
    %v183 = vsel %vm180, %v174, %v175
    %vm184 = vcmask 1043456
    %v185 = vsel %vm184, %v179, %v183
    %187 = vst [vmem:[#allocation2] sm:$0xff] %v185
    %v188 = vld [vmem:[#allocation4] sm:$0xf]
    %189 = vmatpush.xpose.msra.mxu0 0.0
    %190 = vmatpush.xpose.msra.mxu0 0.0
    %191 = vmatpush.xpose.msra.mxu0 0.0
    %192 = vmatpush.xpose.msra.mxu0 0.0
    %193 = vmatpush.xpose.msra.mxu0 0.0
    %194 = vmatpush.xpose.msra.mxu0 0.0
    %195 = vmatpush.xpose.msra.mxu0 0.0
    %196 = vmatpush.xpose.msra.mxu0 0.0
    %197 = vmatpush.xpose.msra.mxu0 0.0
    %198 = vmatpush.xpose.msra.mxu0 0.0
    %199 = vmatpush.xpose.msra.mxu0 0.0
    %200 = vmatpush.xpose.msra.mxu0 0.0
    %201 = vmatpush.xpose.msra.mxu0 0.0
    %202 = vmatpush.xpose.msra.mxu0 0.0
    %203 = vmatpush.xpose.msra.mxu0 0.0
    %204 = vmatpush.xpose.msra.mxu0 %v107
    %205 = vmatmul.f32.gmra.mxu0 %v107
    %v206 = vpop.f32.mrf.mxu0
    %v207 = vadd.f32 0.0, %v206
    %208 = vdwg.mxu0
    %209 = vmatpush.xpose.msra.mxu0 0.0
    %210 = vmatpush.xpose.msra.mxu0 0.0
    %211 = vmatpush.xpose.msra.mxu0 0.0
    %212 = vmatpush.xpose.msra.mxu0 0.0
    %213 = vmatpush.xpose.msra.mxu0 0.0
    %214 = vmatpush.xpose.msra.mxu0 0.0
    %215 = vmatpush.xpose.msra.mxu0 0.0
    %216 = vmatpush.xpose.msra.mxu0 0.0
    %217 = vmatpush.xpose.msra.mxu0 0.0
    %218 = vmatpush.xpose.msra.mxu0 0.0
    %219 = vmatpush.xpose.msra.mxu0 0.0
    %220 = vmatpush.xpose.msra.mxu0 0.0
    %221 = vmatpush.xpose.msra.mxu0 0.0
    %222 = vmatpush.xpose.msra.mxu0 0.0
    %223 = vmatpush.xpose.msra.mxu0 0.0
    %224 = vmatpush.xpose.msra.mxu0 %v127
    %225 = vmatmul.f32.gmra.mxu0 %v127
    %v226 = vpop.f32.mrf.mxu0
    %v227 = vadd.f32 %v207, %v226
    %228 = vdwg.mxu0
    %229 = vmatpush.xpose.msra.mxu0 0.0
    %230 = vmatpush.xpose.msra.mxu0 0.0
    %231 = vmatpush.xpose.msra.mxu0 0.0
    %232 = vmatpush.xpose.msra.mxu0 0.0
    %233 = vmatpush.xpose.msra.mxu0 0.0
    %234 = vmatpush.xpose.msra.mxu0 0.0
    %235 = vmatpush.xpose.msra.mxu0 0.0
    %236 = vmatpush.xpose.msra.mxu0 0.0
    %237 = vmatpush.xpose.msra.mxu0 0.0
    %238 = vmatpush.xpose.msra.mxu0 0.0
    %239 = vmatpush.xpose.msra.mxu0 0.0
    %240 = vmatpush.xpose.msra.mxu0 0.0
    %241 = vmatpush.xpose.msra.mxu0 0.0
    %242 = vmatpush.xpose.msra.mxu0 0.0
    %243 = vmatpush.xpose.msra.mxu0 0.0
    %244 = vmatpush.xpose.msra.mxu0 %v147
    %245 = vmatmul.f32.gmra.mxu0 %v147
    %v246 = vpop.f32.mrf.mxu0
    %v247 = vadd.f32 %v227, %v246
    %248 = vdwg.mxu0
    %249 = vmatpush.xpose.msra.mxu0 0.0
    %250 = vmatpush.xpose.msra.mxu0 0.0
    %251 = vmatpush.xpose.msra.mxu0 0.0
    %252 = vmatpush.xpose.msra.mxu0 0.0
    %253 = vmatpush.xpose.msra.mxu0 0.0
    %254 = vmatpush.xpose.msra.mxu0 0.0
    %255 = vmatpush.xpose.msra.mxu0 0.0
    %256 = vmatpush.xpose.msra.mxu0 0.0
    %257 = vmatpush.xpose.msra.mxu0 0.0
    %258 = vmatpush.xpose.msra.mxu0 0.0
    %259 = vmatpush.xpose.msra.mxu0 0.0
    %260 = vmatpush.xpose.msra.mxu0 0.0
    %261 = vmatpush.xpose.msra.mxu0 0.0
    %262 = vmatpush.xpose.msra.mxu0 0.0
    %263 = vmatpush.xpose.msra.mxu0 0.0
    %264 = vmatpush.xpose.msra.mxu0 %v167
    %265 = vmatmul.f32.gmra.mxu0 %v167
    %v266 = vpop.f32.mrf.mxu0
    %v267 = vadd.f32 %v247, %v266
    %268 = vdwg.mxu0
    %v269 = vadd.f32 %v188, %v267
    %vm270 = vcmask 27648
    %271 = vst.msk [vmem:[#allocation4] sm:$0xf] %vm270, %v269
    // Predicated region
    $region18: #{_pca_whiten.3} parent=1 // pred_check
      _
    $region19: #{_pca_whiten.3} parent=1 // pred_check_branch
      %273 = sbr.rel (0) target = $region21
    $region20: #{_pca_whiten.3} parent=1 // pred_region
      %s274 = sadd.s32 0, 0
      %s275 = smul.u32 4, %s274
      %277 = vsyncadd [#allocation3], 0
      %s278 = smul.addr %s275, 2
      %s279 = scalar_lea.hbm %s3, %s278
      %s281 = sshll.u32 [#allocation2], 4
      %s282 = int_to_ptr.vmem [resolvable:$true] %s281
      %s283 = sshll.u32 %s279, 4
      %s284 = int_to_ptr.hbm [resolvable:$true] %s283
      %286 = dma.vmem_to_hbm [thread:$0]  %s282, 128, %s284, [#allocation3]
    $region21: #{_pca_whiten.3} parent=1 // pred_fallthru
      _
    // Predicated region
    $region22: #{_pca_whiten.3} parent=1 // pred_check
      _
    $region23: #{_pca_whiten.3} parent=1 // pred_check_branch
      %288 = sbr.rel (0) target = $region25
    $region24: #{_pca_whiten.3} parent=1 // pred_region
      %290 = vsyncadd [#allocation5], 0
      %s292 = sshll.u32 [#allocation4], 4
      %s293 = int_to_ptr.vmem [resolvable:$true] %s292
      %s294 = sshll.u32 %s4, 4
      %s295 = int_to_ptr.hbm [resolvable:$true] %s294
      %297 = dma.vmem_to_hbm [thread:$0]  %s293, 64, %s295, [#allocation5]
    $region25: #{_pca_whiten.3} parent=1 // pred_fallthru
      _
    // Predicated region
    $region26: #{_pca_whiten.3} parent=1 // pred_check
      _
    $region27: #{_pca_whiten.3} parent=1 // pred_check_branch
      %299 = sbr.rel (0) target = $region29
    $region28: #{_pca_whiten.3} parent=1 // pred_region
      %301 = dma.done [#allocation3], 128
    $region29: #{_pca_whiten.3} parent=1 // pred_fallthru
      _
    // Predicated region
    $region30: #{_pca_whiten.3} parent=1 // pred_check
      _
    $region31: #{_pca_whiten.3} parent=1 // pred_check_branch
      %303 = sbr.rel (0) target = $region33
    $region32: #{_pca_whiten.3} parent=1 // pred_region
      %305 = dma.done [#allocation5], 64
    $region33: #{_pca_whiten.3} parent=1 // pred_fallthru
      _
    %306 = vsyncpa [#allocation3], 1
    %307 = vsyncpa [#allocation5], 1

</llo_original>
